<compile_context>
chip_gen: v7x
topology: tpu7x:2x2x1
jax: 0.10.0
libtpu: 0.0.40
codegen_flags: <defaults>
</compile_context>

<pallas_src>
import functools
from dataclasses import dataclass

import jax
import jax.numpy as jnp
from jax.experimental import pallas as pl
from jax.experimental.pallas import tpu as pltpu

LN_EPS = 1e-12
MASK_NEG = -1e9
VMEM_LIMIT = 48 * 1024 * 1024      # below v7x's 64 MiB physical VMEM, above v5e/v6e defaults


@dataclass(frozen=True)
class Config:
    vocab: int = 128
    hidden: int = 32
    inter: int = 64
    layers: int = 2
    heads: int = 4
    max_pos: int = 16
    type_vocab: int = 2


def _gelu(x):
    # TODO(synk): HF BERT uses erf-based GELU; tanh approximation used so the op lowers to the EUP.
    return jax.nn.gelu(x, approximate=True)


def _ln(x, g, b, eps=LN_EPS):
    mu = jnp.mean(x, axis=-1, keepdims=True)
    xc = x - mu
    var = jnp.mean(xc * xc, axis=-1, keepdims=True)
    return xc * jax.lax.rsqrt(var + eps) * g + b


# ------------------------- fused transformer-stack kernel -------------------------

def _stack_kernel(emb_hbm_ref, bias_ref, eg_ref, eb_ref,
                  wqkv_ref, bqkv_ref, wo_ref, bo_ref,
                  ln1g_ref, ln1b_ref, wi_ref, bi_ref,
                  wf_ref, bf_ref, ln2g_ref, ln2b_ref,
                  out_ref, dma_sem, *, B, S, NH, D, scale):
    l = pl.program_id(0)
    H = NH * D

    @pl.when(l == 0)
    def _():
        # Embedding sum lives only in HBM; DMA it into the carried output block once and
        # apply the embedding LayerNorm in place (no (M, H) input resident across the stack).
        cp = pltpu.make_async_copy(emb_hbm_ref, out_ref, dma_sem)
        cp.start()
        cp.wait()
        out_ref[...] = _ln(out_ref[...], eg_ref[...], eb_ref[...])

    x = out_ref[...]                                   # [M, H] f32 carry (output block is VMEM-resident)
    x_bf = x.astype(jnp.bfloat16)
    bias3 = bias_ref[...].reshape(B, 1, S)             # additive key mask, broadcast over heads & queries

    # Single fused QKV projection: bf16 operands, f32 accumulation on the MXU.
    qkv = jnp.dot(x_bf, wqkv_ref[0], preferred_element_type=jnp.float32) + bqkv_ref[0]

    # Attention: batched over the batch axis with 3-D einsums per head; softmax math in f32,
    # scale folded into q, softmax divide via EUP reciprocal.
    ctx_heads = []
    for h in range(NH):
        q = (qkv[:, h * D:(h + 1) * D] * scale).reshape(B, S, D).astype(jnp.bfloat16)
        k = qkv[:, H + h * D:H + (h + 1) * D].reshape(B, S, D).astype(jnp.bfloat16)
        v = qkv[:, 2 * H + h * D:2 * H + (h + 1) * D].reshape(B, S, D).astype(jnp.bfloat16)
        s = jnp.einsum("bqd,bkd->bqk", q, k, preferred_element_type=jnp.float32) + bias3
        s = s - jnp.max(s, axis=-1, keepdims=True)
        p = jnp.exp(s)
        p = p * pl.reciprocal(jnp.sum(p, axis=-1, keepdims=True), approx=True)
        ctx = jnp.einsum("bqk,bkd->bqd", p.astype(jnp.bfloat16), v,
                         preferred_element_type=jnp.float32)          # [B, S, D]
        ctx_heads.append(ctx.reshape(B * S, D))
    ctx_all = jnp.concatenate(ctx_heads, axis=-1).astype(jnp.bfloat16)  # [M, H]

    # One full-depth (K=H) output projection instead of NH shallow per-head matmuls.
    attn_out = jnp.dot(ctx_all, wo_ref[0], preferred_element_type=jnp.float32) + bo_ref[0]
    y1 = _ln(attn_out + x, ln1g_ref[0], ln1b_ref[0])

    inter = _gelu(jnp.dot(y1.astype(jnp.bfloat16), wi_ref[0],
                          preferred_element_type=jnp.float32) + bi_ref[0])
    ffn = jnp.dot(inter.astype(jnp.bfloat16), wf_ref[0],
                  preferred_element_type=jnp.float32) + bf_ref[0]
    out_ref[...] = _ln(ffn + y1, ln2g_ref[0], ln2b_ref[0])


def transformer_stack(emb, attn_bias, params, cfg: Config, B, S):
    M = B * S
    H, I, L, NH = cfg.hidden, cfg.inter, cfg.layers, cfg.heads
    D = H // NH
    scale = 1.0 / (D ** 0.5)

    const = lambda shape: pl.BlockSpec(shape, lambda l: (0, 0))
    per_layer = lambda shape: pl.BlockSpec(shape, lambda l: (l, 0, 0))

    # TODO(synk): for v7x dual-TC, a leading "parallel" batch-tile axis would shard the stack,
    # at the cost of re-streaming per-layer weights per batch tile; not worth it at these shapes.
    grid_spec = pltpu.PrefetchScalarGridSpec(
        num_scalar_prefetch=0,
        grid=(L,),
        in_specs=[
            pl.BlockSpec(memory_space=pl.ANY),              # raw embedding sum stays in HBM
            const((B, S)),                                   # additive key mask
            const((1, H)), const((1, H)),                    # embedding LN gamma/beta
            per_layer((1, H, 3 * H)), per_layer((1, 1, 3 * H)),   # wqkv (bf16), bqkv
            per_layer((1, H, H)), per_layer((1, 1, H)),           # wo (bf16), bo
            per_layer((1, 1, H)), per_layer((1, 1, H)),           # ln1 g/b
            per_layer((1, H, I)), per_layer((1, 1, I)),           # wi (bf16), bi
            per_layer((1, I, H)), per_layer((1, 1, H)),           # wf (bf16), bf
            per_layer((1, 1, H)), per_layer((1, 1, H)),           # ln2 g/b
        ],
        out_specs=pl.BlockSpec((M, H), lambda l: (0, 0)),    # same block every layer -> carry
        scratch_shapes=[pltpu.SemaphoreType.DMA(())],
    )

    mm_flops = (2 * M * H * 3 * H + 4 * B * NH * S * S * D + 2 * M * H * H + 4 * M * H * I)
    cost = pl.CostEstimate(
        flops=L * mm_flops,
        transcendentals=L * (B * NH * S * S + M * I),
        bytes_accessed=L * 2 * (3 * H * H + H * H + 2 * H * I) + 4 * M * H * 2 + 4 * B * S,
    )
    return pl.pallas_call(
        functools.partial(_stack_kernel, B=B, S=S, NH=NH, D=D, scale=scale),
        out_shape=jax.ShapeDtypeStruct((M, H), jnp.float32),
        grid_spec=grid_spec,
        compiler_params=pltpu.CompilerParams(
            dimension_semantics=("arbitrary",),
            vmem_limit_bytes=VMEM_LIMIT),
        cost_estimate=cost,
    )(emb, attn_bias,
      params["emb_ln_g"].reshape(1, H), params["emb_ln_b"].reshape(1, H),
      params["wqkv"], params["bqkv"], params["wo"], params["bo"],
      params["ln1_g"], params["ln1_b"], params["wi"], params["bi"],
      params["wf"], params["bf"], params["ln2_g"], params["ln2_b"])


# ------------------------- fused MLM-transform + NSP-head kernel -------------------------

def _heads_kernel(seq_ref, cls_ref, wt_ref, bt_ref, tg_ref, tb_ref,
                  wp_ref, bp_ref, wsr_ref, bsr_ref, h_ref, nsp_ref):
    # MLM transform: dense + GELU + LN, emitted in bf16 for the tied-decoder matmul.
    t = jnp.dot(seq_ref[...].astype(jnp.bfloat16), wt_ref[...],
                preferred_element_type=jnp.float32) + bt_ref[...]
    h_ref[...] = _ln(_gelu(t), tg_ref[...], tb_ref[...]).astype(jnp.bfloat16)
    # NSP head: pooler (GELU activation per the reference override) on [CLS] + dense(2).
    pooled = _gelu(jnp.dot(cls_ref[...].astype(jnp.bfloat16), wp_ref[...],
                           preferred_element_type=jnp.float32) + bp_ref[...])
    nsp_ref[...] = jnp.dot(pooled, wsr_ref[...],
                           preferred_element_type=jnp.float32) + bsr_ref[...]


def heads_prologue(seq_out, cls, params, cfg: Config):
    M, H = seq_out.shape
    B = cls.shape[0]
    vmem = pl.BlockSpec(memory_space=pltpu.MemorySpace.VMEM)
    return pl.pallas_call(
        _heads_kernel,
        out_shape=(jax.ShapeDtypeStruct((M, H), jnp.bfloat16),
                   jax.ShapeDtypeStruct((B, 2), jnp.float32)),
        in_specs=[vmem] * 10,
        out_specs=(vmem, vmem),
    )(seq_out, cls,
      params["wt"], params["bt"].reshape(1, H),
      params["tln_g"].reshape(1, H), params["tln_b"].reshape(1, H),
      params["wp"], params["bp"].reshape(1, H),
      params["wsr"], params["bsr"].reshape(1, 2))


# ------------------------- tied MLM decoder (vocab-tiled, TC-parallel) -------------------------

def _decoder_kernel(h_ref, embt_ref, db_ref, o_ref):
    # Both operands bf16, f32 accumulation; word_emb already pre-transposed to [H, V]
    # so no per-tile in-kernel transpose is needed.
    o_ref[...] = jnp.dot(h_ref[...], embt_ref[...],
                         preferred_element_type=jnp.float32) + db_ref[...]


def mlm_decoder(mlm_hidden, params, cfg: Config):
    M, H = mlm_hidden.shape
    V = cfg.vocab
    TN = min(V, 512)                          # lane-dense, 128-multiple vocab tiles
    emb_t = params["word_emb"].T              # [H, V] bf16, one cheap XLA transpose per forward

    grid_spec = pltpu.PrefetchScalarGridSpec(
        num_scalar_prefetch=0,
        grid=(pl.cdiv(V, TN),),
        in_specs=[
            pl.BlockSpec((M, H), lambda j: (0, 0)),      # MLM transform output (bf16)
            pl.BlockSpec((H, TN), lambda j: (0, j)),     # tied word_emb.T tile (bf16)
            pl.BlockSpec((1, TN), lambda j: (0, j)),     # decoder bias tile
        ],
        out_specs=pl.BlockSpec((M, TN), lambda j: (0, j)),
    )
    cost = pl.CostEstimate(flops=2 * M * H * V, transcendentals=0,
                           bytes_accessed=2 * H * V + 2 * M * H + 4 * M * V + 4 * V)
    return pl.pallas_call(
        _decoder_kernel,
        out_shape=jax.ShapeDtypeStruct((M, V), jnp.float32),
        grid_spec=grid_spec,
        compiler_params=pltpu.CompilerParams(
            dimension_semantics=("parallel",),          # independent vocab tiles -> v7x dual-TC
            vmem_limit_bytes=VMEM_LIMIT),
        cost_estimate=cost,
    )(mlm_hidden, emb_t, params["dec_b"].reshape(1, V))


# ------------------------- parameters -------------------------

def init_params(key, cfg: Config):
    def nrm(k, shape, dtype=jnp.float32):
        return (0.02 * jax.random.normal(k, shape, jnp.float32)).astype(dtype)

    H, I, V, L = cfg.hidden, cfg.inter, cfg.vocab, cfg.layers
    keys = iter(jax.random.split(key, 8 * L + 16))
    p = {
        # Matmul weights stored bf16 (MXU-native); biases / LN params kept f32.
        "word_emb": nrm(next(keys), (V, H), jnp.bfloat16),
        "pos_emb": nrm(next(keys), (cfg.max_pos, H)),
        "type_emb": nrm(next(keys), (cfg.type_vocab, H)),
        "emb_ln_g": jnp.ones((H,), jnp.float32),
        "emb_ln_b": jnp.zeros((H,), jnp.float32),
        # MLM transform head (decoder weight tied to word_emb)
        "wt": nrm(next(keys), (H, H), jnp.bfloat16), "bt": jnp.zeros((H,), jnp.float32),
        "tln_g": jnp.ones((H,), jnp.float32), "tln_b": jnp.zeros((H,), jnp.float32),
        "dec_b": jnp.zeros((V,), jnp.float32),
        # pooler (GELU) + NSP head
        "wp": nrm(next(keys), (H, H), jnp.bfloat16), "bp": jnp.zeros((H,), jnp.float32),
        "wsr": nrm(next(keys), (H, 2)), "bsr": jnp.zeros((2,), jnp.float32),
    }
    # Per-layer weights: QKV pre-fused into [H, 3H] and everything stacked along the layer
    # axis so the stack kernel streams one layer's (bf16) weights per grid step.
    wqkv, bqkv, wo, bo, ln1g, ln1b, wi, bi, wf, bf_, ln2g, ln2b = ([] for _ in range(12))
    for _ in range(L):
        wq, wk, wv = nrm(next(keys), (H, H)), nrm(next(keys), (H, H)), nrm(next(keys), (H, H))
        wqkv.append(jnp.concatenate([wq, wk, wv], axis=1).astype(jnp.bfloat16))
        bqkv.append(jnp.zeros((1, 3 * H), jnp.float32))
        wo.append(nrm(next(keys), (H, H), jnp.bfloat16)); bo.append(jnp.zeros((1, H), jnp.float32))
        ln1g.append(jnp.ones((1, H), jnp.float32)); ln1b.append(jnp.zeros((1, H), jnp.float32))
        wi.append(nrm(next(keys), (H, I), jnp.bfloat16)); bi.append(jnp.zeros((1, I), jnp.float32))
        wf.append(nrm(next(keys), (I, H), jnp.bfloat16)); bf_.append(jnp.zeros((1, H), jnp.float32))
        ln2g.append(jnp.ones((1, H), jnp.float32)); ln2b.append(jnp.zeros((1, H), jnp.float32))
    p.update({
        "wqkv": jnp.stack(wqkv), "bqkv": jnp.stack(bqkv),
        "wo": jnp.stack(wo), "bo": jnp.stack(bo),
        "ln1_g": jnp.stack(ln1g), "ln1_b": jnp.stack(ln1b),
        "wi": jnp.stack(wi), "bi": jnp.stack(bi),
        "wf": jnp.stack(wf), "bf": jnp.stack(bf_),
        "ln2_g": jnp.stack(ln2g), "ln2_b": jnp.stack(ln2b),
    })
    return p


# ------------------------- forward -------------------------

def kcbert_pretraining_forward(params, input_ids, token_type_ids, cfg: Config):
    B, S = input_ids.shape
    H = cfg.hidden

    # attention_mask = (input_ids != 0) -> tiny [B, S] additive key bias (finite -1e9, no -inf).
    attn_bias = (1.0 - (input_ids != 0).astype(jnp.float32)) * MASK_NEG

    # Embedding gathers are XLA glue; the sum stays in HBM and LN is fused into the stack kernel.
    emb = (params["word_emb"][input_ids].astype(jnp.float32)
           + params["pos_emb"][:S][None, :, :]
           + params["type_emb"][token_type_ids]).reshape(B * S, H)

    seq_out = transformer_stack(emb, attn_bias, params, cfg, B, S)        # [B*S, H] f32

    cls = seq_out.reshape(B, S, H)[:, 0, :]                               # [B, H]
    mlm_hidden, seq_relationship_logits = heads_prologue(seq_out, cls, params, cfg)

    prediction_logits = mlm_decoder(mlm_hidden, params, cfg).reshape(B, S, cfg.vocab)

    return prediction_logits, seq_relationship_logits


# ------------------------- main -------------------------

if __name__ == "__main__":
    cfg = Config(vocab=128, hidden=32, inter=64, layers=2, heads=4, max_pos=16, type_vocab=2)

    key = jax.random.PRNGKey(0)
    pkey, ikey = jax.random.split(key)
    params = init_params(pkey, cfg)

    B, S = 2, 8
    src_input_sentence = jax.random.randint(ikey, (B, S), 1, cfg.vocab, dtype=jnp.int32)
    src_input_sentence = src_input_sentence.at[1, -2:].set(0)             # padding tokens
    src_segment = jnp.concatenate(
        [jnp.zeros((B, S // 2), jnp.int32), jnp.ones((B, S // 2), jnp.int32)], axis=1)

    pred_logits, seq_rel_logits = kcbert_pretraining_forward(
        params, src_input_sentence, src_segment, cfg)
    jax.block_until_ready((pred_logits, seq_rel_logits))

    assert pred_logits.shape == (B, S, cfg.vocab)
    assert seq_rel_logits.shape == (B, 2)
    assert bool(jnp.all(jnp.isfinite(pred_logits))) and bool(jnp.all(jnp.isfinite(seq_rel_logits)))
    print("KERNEL_OK")
</pallas_src>

<mosaic_0001>
module attributes {stable_mosaic.version = 11 : i64} {
  func.func @_stack_kernel(%arg0: i32, %arg1: memref<16x32xf32, #tpu.memory_space<any>>, %arg2: memref<2x8xf32, #tpu.memory_space<vmem>>, %arg3: memref<1x32xf32, #tpu.memory_space<vmem>>, %arg4: memref<1x32xf32, #tpu.memory_space<vmem>>, %arg5: memref<1x32x96xbf16, #tpu.memory_space<vmem>>, %arg6: memref<1x1x96xf32, #tpu.memory_space<vmem>>, %arg7: memref<1x32x32xbf16, #tpu.memory_space<vmem>>, %arg8: memref<1x1x32xf32, #tpu.memory_space<vmem>>, %arg9: memref<1x1x32xf32, #tpu.memory_space<vmem>>, %arg10: memref<1x1x32xf32, #tpu.memory_space<vmem>>, %arg11: memref<1x32x64xbf16, #tpu.memory_space<vmem>>, %arg12: memref<1x1x64xf32, #tpu.memory_space<vmem>>, %arg13: memref<1x64x32xbf16, #tpu.memory_space<vmem>>, %arg14: memref<1x1x32xf32, #tpu.memory_space<vmem>>, %arg15: memref<1x1x32xf32, #tpu.memory_space<vmem>>, %arg16: memref<1x1x32xf32, #tpu.memory_space<vmem>>, %arg17: memref<16x32xf32, #tpu.memory_space<vmem>>, %arg18: memref<!tpu.dma_semaphore, #tpu.memory_space<semaphore_mem>>) attributes {dimension_semantics = [#tpu.dimension_semantics<arbitrary>], iteration_bounds = array<i64: 2>, scalar_prefetch = 0 : i64, scratch_operands = 1 : i64, tpu.core_type = #tpu.core_type<tc>, window_params = [{}, {pipeline_mode = #tpu.pipeline_mode<synchronous>, transform_indices = @transform_1, window_bounds = array<i64: 2, 8>}, {pipeline_mode = #tpu.pipeline_mode<synchronous>, transform_indices = @transform_2, window_bounds = array<i64: 1, 32>}, {pipeline_mode = #tpu.pipeline_mode<synchronous>, transform_indices = @transform_3, window_bounds = array<i64: 1, 32>}, {transform_indices = @transform_4, window_bounds = array<i64: 1, 32, 96>}, {transform_indices = @transform_5, window_bounds = array<i64: 1, 1, 96>}, {transform_indices = @transform_6, window_bounds = array<i64: 1, 32, 32>}, {transform_indices = @transform_7, window_bounds = array<i64: 1, 1, 32>}, {transform_indices = @transform_8, window_bounds = array<i64: 1, 1, 32>}, {transform_indices = @transform_9, window_bounds = array<i64: 1, 1, 32>}, {transform_indices = @transform_10, window_bounds = array<i64: 1, 32, 64>}, {transform_indices = @transform_11, window_bounds = array<i64: 1, 1, 64>}, {transform_indices = @transform_12, window_bounds = array<i64: 1, 64, 32>}, {transform_indices = @transform_13, window_bounds = array<i64: 1, 1, 32>}, {transform_indices = @transform_14, window_bounds = array<i64: 1, 1, 32>}, {transform_indices = @transform_15, window_bounds = array<i64: 1, 1, 32>}, {pipeline_mode = #tpu.pipeline_mode<synchronous>, transform_indices = @transform_16, window_bounds = array<i64: 16, 32>}]} {
    %c0_i32 = arith.constant 0 : i32
    %0 = arith.cmpi eq, %arg0, %c0_i32 : i32
    %1 = arith.extui %0 : i1 to i32
    %c0_i32_0 = arith.constant 0 : i32
    %2 = arith.cmpi ne, %1, %c0_i32_0 : i32
    scf.if %2 {
      tpu.enqueue_dma source(%arg1 : memref<16x32xf32, #tpu.memory_space<any>>) target(%arg17 : memref<16x32xf32, #tpu.memory_space<vmem>>) target_semaphore(%arg18 : memref<!tpu.dma_semaphore, #tpu.memory_space<semaphore_mem>>)
      tpu.wait_dma2 semaphore(%arg18 : memref<!tpu.dma_semaphore, #tpu.memory_space<semaphore_mem>>) src(%arg1 : memref<16x32xf32, #tpu.memory_space<any>>) dst(%arg17 : memref<16x32xf32, #tpu.memory_space<vmem>>)
      %c0_79 = arith.constant 0 : index
      %c0_80 = arith.constant 0 : index
      %211 = vector.load %arg17[%c0_79, %c0_80] : memref<16x32xf32, #tpu.memory_space<vmem>>, vector<16x32xf32>
      %c0_81 = arith.constant 0 : index
      %c0_82 = arith.constant 0 : index
      %212 = vector.load %arg3[%c0_81, %c0_82] : memref<1x32xf32, #tpu.memory_space<vmem>>, vector<1x32xf32>
      %c0_83 = arith.constant 0 : index
      %c0_84 = arith.constant 0 : index
      %213 = vector.load %arg4[%c0_83, %c0_84] : memref<1x32xf32, #tpu.memory_space<vmem>>, vector<1x32xf32>
      %cst_85 = arith.constant dense<0.000000e+00> : vector<16xf32>
      %214 = vector.multi_reduction <add>, %211, %cst_85 [1] : vector<16x32xf32> to vector<16xf32>
      %215 = vector.shape_cast %214 : vector<16xf32> to vector<16x1xf32>
      %cst_86 = arith.constant 3.200000e+01 : f32
      %216 = vector.broadcast %cst_86 : f32 to vector<16x1xf32>
      %217 = arith.divf %215, %216 : vector<16x1xf32>
      %218 = vector.broadcast %217 : vector<16x1xf32> to vector<16x32xf32>
      %219 = arith.subf %211, %218 : vector<16x32xf32>
      %220 = arith.mulf %219, %219 : vector<16x32xf32>
      %cst_87 = arith.constant dense<0.000000e+00> : vector<16xf32>
      %221 = vector.multi_reduction <add>, %220, %cst_87 [1] : vector<16x32xf32> to vector<16xf32>
      %222 = vector.shape_cast %221 : vector<16xf32> to vector<16x1xf32>
      %cst_88 = arith.constant 3.200000e+01 : f32
      %223 = vector.broadcast %cst_88 : f32 to vector<16x1xf32>
      %224 = arith.divf %222, %223 : vector<16x1xf32>
      %cst_89 = arith.constant 9.99999996E-13 : f32
      %225 = vector.broadcast %cst_89 : f32 to vector<16x1xf32>
      %226 = arith.addf %224, %225 : vector<16x1xf32>
      %227 = math.rsqrt %226 : vector<16x1xf32>
      %228 = vector.broadcast %227 : vector<16x1xf32> to vector<16x32xf32>
      %229 = arith.mulf %219, %228 : vector<16x32xf32>
      %230 = vector.broadcast %212 : vector<1x32xf32> to vector<16x32xf32>
      %231 = arith.mulf %229, %230 : vector<16x32xf32>
      %232 = vector.broadcast %213 : vector<1x32xf32> to vector<16x32xf32>
      %233 = arith.addf %231, %232 : vector<16x32xf32>
      %c0_90 = arith.constant 0 : index
      %c0_91 = arith.constant 0 : index
      %234 = vector.load %arg17[%c0_90, %c0_91] : memref<16x32xf32, #tpu.memory_space<vmem>>, vector<16x32xf32>
      tpu.vector_store %arg17[%c0_90, %c0_91], %233 {strides = array<i32>} : memref<16x32xf32, #tpu.memory_space<vmem>>, vector<16x32xf32>,
    } else {
    }
    %c0 = arith.constant 0 : index
    %c0_1 = arith.constant 0 : index
    %3 = vector.load %arg17[%c0, %c0_1] : memref<16x32xf32, #tpu.memory_space<vmem>>, vector<16x32xf32>
    %4 = arith.truncf %3 : vector<16x32xf32> to vector<16x32xbf16>
    %c0_2 = arith.constant 0 : index
    %c0_3 = arith.constant 0 : index
    %5 = vector.load %arg2[%c0_2, %c0_3] : memref<2x8xf32, #tpu.memory_space<vmem>>, vector<2x8xf32>
    %6 = vector.shape_cast %5 : vector<2x8xf32> to vector<2x1x8xf32>
    %c0_4 = arith.constant 0 : index
    %c0_5 = arith.constant 0 : index
    %c0_6 = arith.constant 0 : index
    %7 = vector.load %arg5[%c0_4, %c0_5, %c0_6] : memref<1x32x96xbf16, #tpu.memory_space<vmem>>, vector<1x32x96xbf16>
    %8 = vector.shape_cast %7 : vector<1x32x96xbf16> to vector<32x96xbf16>
    %cst = arith.constant dense<0.000000e+00> : vector<16x96xf32>
    %9 = tpu.matmul %4, %8, %cst {dimension_numbers = #tpu.dot_dimension_numbers<[1], [0], [0], [1], [0, 0, 1, 1], [], []>} : vector<16x32xbf16>, vector<32x96xbf16>, vector<16x96xf32> -> vector<16x96xf32>
    %c0_7 = arith.constant 0 : index
    %c0_8 = arith.constant 0 : index
    %c0_9 = arith.constant 0 : index
    %10 = vector.load %arg6[%c0_7, %c0_8, %c0_9] : memref<1x1x96xf32, #tpu.memory_space<vmem>>, vector<1x1x96xf32>
    %11 = vector.shape_cast %10 : vector<1x1x96xf32> to vector<1x96xf32>
    %12 = vector.broadcast %11 : vector<1x96xf32> to vector<16x96xf32>
    %13 = arith.addf %9, %12 : vector<16x96xf32>
    %14 = vector.extract_strided_slice %13 {offsets = [0, 0], sizes = [16, 8], strides = [1, 1]} : vector<16x96xf32> to vector<16x8xf32>
    %cst_10 = arith.constant 0.353553385 : f32
    %15 = vector.broadcast %cst_10 : f32 to vector<16x8xf32>
    %16 = arith.mulf %14, %15 : vector<16x8xf32>
    %17 = vector.shape_cast %16 : vector<16x8xf32> to vector<2x8x8xf32>
    %18 = arith.truncf %17 : vector<2x8x8xf32> to vector<2x8x8xbf16>
    %19 = vector.extract_strided_slice %13 {offsets = [0, 32], sizes = [16, 8], strides = [1, 1]} : vector<16x96xf32> to vector<16x8xf32>
    %20 = vector.shape_cast %19 : vector<16x8xf32> to vector<2x8x8xf32>
    %21 = arith.truncf %20 : vector<2x8x8xf32> to vector<2x8x8xbf16>
    %22 = vector.extract_strided_slice %13 {offsets = [0, 64], sizes = [16, 8], strides = [1, 1]} : vector<16x96xf32> to vector<16x8xf32>
    %23 = vector.shape_cast %22 : vector<16x8xf32> to vector<2x8x8xf32>
    %24 = arith.truncf %23 : vector<2x8x8xf32> to vector<2x8x8xbf16>
    "tpu.trace_start"() <{level = 10 : i32, message = "bqd,bkd->bqk"}> : () -> ()
    %cst_11 = arith.constant dense<0.000000e+00> : vector<2x8x8xf32>
    %25 = tpu.matmul %18, %21, %cst_11 {dimension_numbers = #tpu.dot_dimension_numbers<[2], [2], [1], [1], [0, 0, 0, 1, 1, 1], [0], [0]>} : vector<2x8x8xbf16>, vector<2x8x8xbf16>, vector<2x8x8xf32> -> vector<2x8x8xf32>
    "tpu.trace_stop"() : () -> ()
    %26 = vector.broadcast %6 : vector<2x1x8xf32> to vector<2x8x8xf32>
    %27 = arith.addf %25, %26 : vector<2x8x8xf32>
    %cst_12 = arith.constant dense<0xFF800000> : vector<2x8xf32>
    %28 = vector.multi_reduction <maximumf>, %27, %cst_12 [2] : vector<2x8x8xf32> to vector<2x8xf32>
    %29 = vector.shape_cast %28 : vector<2x8xf32> to vector<2x8x1xf32>
    %30 = vector.broadcast %29 : vector<2x8x1xf32> to vector<2x8x8xf32>
    %31 = arith.subf %27, %30 : vector<2x8x8xf32>
    %32 = math.exp %31 : vector<2x8x8xf32>
    %cst_13 = arith.constant dense<0.000000e+00> : vector<2x8xf32>
    %33 = vector.multi_reduction <add>, %32, %cst_13 [2] : vector<2x8x8xf32> to vector<2x8xf32>
    %34 = vector.shape_cast %33 : vector<2x8xf32> to vector<2x8x1xf32>
    %35 = tpu.reciprocal %34 {approx = true} : vector<2x8x1xf32> -> vector<2x8x1xf32>
    %36 = vector.broadcast %35 : vector<2x8x1xf32> to vector<2x8x8xf32>
    %37 = arith.mulf %32, %36 : vector<2x8x8xf32>
    %38 = arith.truncf %37 : vector<2x8x8xf32> to vector<2x8x8xbf16>
    "tpu.trace_start"() <{level = 10 : i32, message = "bqk,bkd->bqd"}> : () -> ()
    %cst_14 = arith.constant dense<0.000000e+00> : vector<2x8x8xf32>
    %39 = tpu.matmul %38, %24, %cst_14 {dimension_numbers = #tpu.dot_dimension_numbers<[2], [1], [1], [2], [0, 0, 0, 1, 1, 2], [0], [0]>} : vector<2x8x8xbf16>, vector<2x8x8xbf16>, vector<2x8x8xf32> -> vector<2x8x8xf32>
    "tpu.trace_stop"() : () -> ()
    %40 = vector.shape_cast %39 : vector<2x8x8xf32> to vector<16x8xf32>
    %41 = vector.extract_strided_slice %13 {offsets = [0, 8], sizes = [16, 8], strides = [1, 1]} : vector<16x96xf32> to vector<16x8xf32>
    %cst_15 = arith.constant 0.353553385 : f32
    %42 = vector.broadcast %cst_15 : f32 to vector<16x8xf32>
    %43 = arith.mulf %41, %42 : vector<16x8xf32>
    %44 = vector.shape_cast %43 : vector<16x8xf32> to vector<2x8x8xf32>
    %45 = arith.truncf %44 : vector<2x8x8xf32> to vector<2x8x8xbf16>
    %46 = vector.extract_strided_slice %13 {offsets = [0, 40], sizes = [16, 8], strides = [1, 1]} : vector<16x96xf32> to vector<16x8xf32>
    %47 = vector.shape_cast %46 : vector<16x8xf32> to vector<2x8x8xf32>
    %48 = arith.truncf %47 : vector<2x8x8xf32> to vector<2x8x8xbf16>
    %49 = vector.extract_strided_slice %13 {offsets = [0, 72], sizes = [16, 8], strides = [1, 1]} : vector<16x96xf32> to vector<16x8xf32>
    %50 = vector.shape_cast %49 : vector<16x8xf32> to vector<2x8x8xf32>
    %51 = arith.truncf %50 : vector<2x8x8xf32> to vector<2x8x8xbf16>
    "tpu.trace_start"() <{level = 10 : i32, message = "bqd,bkd->bqk"}> : () -> ()
    %cst_16 = arith.constant dense<0.000000e+00> : vector<2x8x8xf32>
    %52 = tpu.matmul %45, %48, %cst_16 {dimension_numbers = #tpu.dot_dimension_numbers<[2], [2], [1], [1], [0, 0, 0, 1, 1, 1], [0], [0]>} : vector<2x8x8xbf16>, vector<2x8x8xbf16>, vector<2x8x8xf32> -> vector<2x8x8xf32>
    "tpu.trace_stop"() : () -> ()
    %53 = vector.broadcast %6 : vector<2x1x8xf32> to vector<2x8x8xf32>
    %54 = arith.addf %52, %53 : vector<2x8x8xf32>
    %cst_17 = arith.constant dense<0xFF800000> : vector<2x8xf32>
    %55 = vector.multi_reduction <maximumf>, %54, %cst_17 [2] : vector<2x8x8xf32> to vector<2x8xf32>
    %56 = vector.shape_cast %55 : vector<2x8xf32> to vector<2x8x1xf32>
    %57 = vector.broadcast %56 : vector<2x8x1xf32> to vector<2x8x8xf32>
    %58 = arith.subf %54, %57 : vector<2x8x8xf32>
    %59 = math.exp %58 : vector<2x8x8xf32>
    %cst_18 = arith.constant dense<0.000000e+00> : vector<2x8xf32>
    %60 = vector.multi_reduction <add>, %59, %cst_18 [2] : vector<2x8x8xf32> to vector<2x8xf32>
    %61 = vector.shape_cast %60 : vector<2x8xf32> to vector<2x8x1xf32>
    %62 = tpu.reciprocal %61 {approx = true} : vector<2x8x1xf32> -> vector<2x8x1xf32>
    %63 = vector.broadcast %62 : vector<2x8x1xf32> to vector<2x8x8xf32>
    %64 = arith.mulf %59, %63 : vector<2x8x8xf32>
    %65 = arith.truncf %64 : vector<2x8x8xf32> to vector<2x8x8xbf16>
    "tpu.trace_start"() <{level = 10 : i32, message = "bqk,bkd->bqd"}> : () -> ()
    %cst_19 = arith.constant dense<0.000000e+00> : vector<2x8x8xf32>
    %66 = tpu.matmul %65, %51, %cst_19 {dimension_numbers = #tpu.dot_dimension_numbers<[2], [1], [1], [2], [0, 0, 0, 1, 1, 2], [0], [0]>} : vector<2x8x8xbf16>, vector<2x8x8xbf16>, vector<2x8x8xf32> -> vector<2x8x8xf32>
    "tpu.trace_stop"() : () -> ()
    %67 = vector.shape_cast %66 : vector<2x8x8xf32> to vector<16x8xf32>
    %68 = vector.extract_strided_slice %13 {offsets = [0, 16], sizes = [16, 8], strides = [1, 1]} : vector<16x96xf32> to vector<16x8xf32>
    %cst_20 = arith.constant 0.353553385 : f32
    %69 = vector.broadcast %cst_20 : f32 to vector<16x8xf32>
    %70 = arith.mulf %68, %69 : vector<16x8xf32>
    %71 = vector.shape_cast %70 : vector<16x8xf32> to vector<2x8x8xf32>
    %72 = arith.truncf %71 : vector<2x8x8xf32> to vector<2x8x8xbf16>
    %73 = vector.extract_strided_slice %13 {offsets = [0, 48], sizes = [16, 8], strides = [1, 1]} : vector<16x96xf32> to vector<16x8xf32>
    %74 = vector.shape_cast %73 : vector<16x8xf32> to vector<2x8x8xf32>
    %75 = arith.truncf %74 : vector<2x8x8xf32> to vector<2x8x8xbf16>
    %76 = vector.extract_strided_slice %13 {offsets = [0, 80], sizes = [16, 8], strides = [1, 1]} : vector<16x96xf32> to vector<16x8xf32>
    %77 = vector.shape_cast %76 : vector<16x8xf32> to vector<2x8x8xf32>
    %78 = arith.truncf %77 : vector<2x8x8xf32> to vector<2x8x8xbf16>
    "tpu.trace_start"() <{level = 10 : i32, message = "bqd,bkd->bqk"}> : () -> ()
    %cst_21 = arith.constant dense<0.000000e+00> : vector<2x8x8xf32>
    %79 = tpu.matmul %72, %75, %cst_21 {dimension_numbers = #tpu.dot_dimension_numbers<[2], [2], [1], [1], [0, 0, 0, 1, 1, 1], [0], [0]>} : vector<2x8x8xbf16>, vector<2x8x8xbf16>, vector<2x8x8xf32> -> vector<2x8x8xf32>
    "tpu.trace_stop"() : () -> ()
    %80 = vector.broadcast %6 : vector<2x1x8xf32> to vector<2x8x8xf32>
    %81 = arith.addf %79, %80 : vector<2x8x8xf32>
    %cst_22 = arith.constant dense<0xFF800000> : vector<2x8xf32>
    %82 = vector.multi_reduction <maximumf>, %81, %cst_22 [2] : vector<2x8x8xf32> to vector<2x8xf32>
    %83 = vector.shape_cast %82 : vector<2x8xf32> to vector<2x8x1xf32>
    %84 = vector.broadcast %83 : vector<2x8x1xf32> to vector<2x8x8xf32>
    %85 = arith.subf %81, %84 : vector<2x8x8xf32>
    %86 = math.exp %85 : vector<2x8x8xf32>
    %cst_23 = arith.constant dense<0.000000e+00> : vector<2x8xf32>
    %87 = vector.multi_reduction <add>, %86, %cst_23 [2] : vector<2x8x8xf32> to vector<2x8xf32>
    %88 = vector.shape_cast %87 : vector<2x8xf32> to vector<2x8x1xf32>
    %89 = tpu.reciprocal %88 {approx = true} : vector<2x8x1xf32> -> vector<2x8x1xf32>
    %90 = vector.broadcast %89 : vector<2x8x1xf32> to vector<2x8x8xf32>
    %91 = arith.mulf %86, %90 : vector<2x8x8xf32>
    %92 = arith.truncf %91 : vector<2x8x8xf32> to vector<2x8x8xbf16>
    "tpu.trace_start"() <{level = 10 : i32, message = "bqk,bkd->bqd"}> : () -> ()
    %cst_24 = arith.constant dense<0.000000e+00> : vector<2x8x8xf32>
    %93 = tpu.matmul %92, %78, %cst_24 {dimension_numbers = #tpu.dot_dimension_numbers<[2], [1], [1], [2], [0, 0, 0, 1, 1, 2], [0], [0]>} : vector<2x8x8xbf16>, vector<2x8x8xbf16>, vector<2x8x8xf32> -> vector<2x8x8xf32>
    "tpu.trace_stop"() : () -> ()
    %94 = vector.shape_cast %93 : vector<2x8x8xf32> to vector<16x8xf32>
    %95 = vector.extract_strided_slice %13 {offsets = [0, 24], sizes = [16, 8], strides = [1, 1]} : vector<16x96xf32> to vector<16x8xf32>
    %cst_25 = arith.constant 0.353553385 : f32
    %96 = vector.broadcast %cst_25 : f32 to vector<16x8xf32>
    %97 = arith.mulf %95, %96 : vector<16x8xf32>
    %98 = vector.shape_cast %97 : vector<16x8xf32> to vector<2x8x8xf32>
    %99 = arith.truncf %98 : vector<2x8x8xf32> to vector<2x8x8xbf16>
    %100 = vector.extract_strided_slice %13 {offsets = [0, 56], sizes = [16, 8], strides = [1, 1]} : vector<16x96xf32> to vector<16x8xf32>
    %101 = vector.shape_cast %100 : vector<16x8xf32> to vector<2x8x8xf32>
    %102 = arith.truncf %101 : vector<2x8x8xf32> to vector<2x8x8xbf16>
    %103 = vector.extract_strided_slice %13 {offsets = [0, 88], sizes = [16, 8], strides = [1, 1]} : vector<16x96xf32> to vector<16x8xf32>
    %104 = vector.shape_cast %103 : vector<16x8xf32> to vector<2x8x8xf32>
    %105 = arith.truncf %104 : vector<2x8x8xf32> to vector<2x8x8xbf16>
    "tpu.trace_start"() <{level = 10 : i32, message = "bqd,bkd->bqk"}> : () -> ()
    %cst_26 = arith.constant dense<0.000000e+00> : vector<2x8x8xf32>
    %106 = tpu.matmul %99, %102, %cst_26 {dimension_numbers = #tpu.dot_dimension_numbers<[2], [2], [1], [1], [0, 0, 0, 1, 1, 1], [0], [0]>} : vector<2x8x8xbf16>, vector<2x8x8xbf16>, vector<2x8x8xf32> -> vector<2x8x8xf32>
    "tpu.trace_stop"() : () -> ()
    %107 = vector.broadcast %6 : vector<2x1x8xf32> to vector<2x8x8xf32>
    %108 = arith.addf %106, %107 : vector<2x8x8xf32>
    %cst_27 = arith.constant dense<0xFF800000> : vector<2x8xf32>
    %109 = vector.multi_reduction <maximumf>, %108, %cst_27 [2] : vector<2x8x8xf32> to vector<2x8xf32>
    %110 = vector.shape_cast %109 : vector<2x8xf32> to vector<2x8x1xf32>
    %111 = vector.broadcast %110 : vector<2x8x1xf32> to vector<2x8x8xf32>
    %112 = arith.subf %108, %111 : vector<2x8x8xf32>
    %113 = math.exp %112 : vector<2x8x8xf32>
    %cst_28 = arith.constant dense<0.000000e+00> : vector<2x8xf32>
    %114 = vector.multi_reduction <add>, %113, %cst_28 [2] : vector<2x8x8xf32> to vector<2x8xf32>
    %115 = vector.shape_cast %114 : vector<2x8xf32> to vector<2x8x1xf32>
    %116 = tpu.reciprocal %115 {approx = true} : vector<2x8x1xf32> -> vector<2x8x1xf32>
    %117 = vector.broadcast %116 : vector<2x8x1xf32> to vector<2x8x8xf32>
    %118 = arith.mulf %113, %117 : vector<2x8x8xf32>
    %119 = arith.truncf %118 : vector<2x8x8xf32> to vector<2x8x8xbf16>
    "tpu.trace_start"() <{level = 10 : i32, message = "bqk,bkd->bqd"}> : () -> ()
    %cst_29 = arith.constant dense<0.000000e+00> : vector<2x8x8xf32>
    %120 = tpu.matmul %119, %105, %cst_29 {dimension_numbers = #tpu.dot_dimension_numbers<[2], [1], [1], [2], [0, 0, 0, 1, 1, 2], [0], [0]>} : vector<2x8x8xbf16>, vector<2x8x8xbf16>, vector<2x8x8xf32> -> vector<2x8x8xf32>
    "tpu.trace_stop"() : () -> ()
    %121 = vector.shape_cast %120 : vector<2x8x8xf32> to vector<16x8xf32>
    %122 = tpu.concatenate %40, %67, %94, %121 in 1 : vector<16x8xf32>, vector<16x8xf32>, vector<16x8xf32>, vector<16x8xf32> -> vector<16x32xf32>
    %123 = arith.truncf %122 : vector<16x32xf32> to vector<16x32xbf16>
    %c0_30 = arith.constant 0 : index
    %c0_31 = arith.constant 0 : index
    %c0_32 = arith.constant 0 : index
    %124 = vector.load %arg7[%c0_30, %c0_31, %c0_32] : memref<1x32x32xbf16, #tpu.memory_space<vmem>>, vector<1x32x32xbf16>
    %125 = vector.shape_cast %124 : vector<1x32x32xbf16> to vector<32x32xbf16>
    %cst_33 = arith.constant dense<0.000000e+00> : vector<16x32xf32>
    %126 = tpu.matmul %123, %125, %cst_33 {dimension_numbers = #tpu.dot_dimension_numbers<[1], [0], [0], [1], [0, 0, 1, 1], [], []>} : vector<16x32xbf16>, vector<32x32xbf16>, vector<16x32xf32> -> vector<16x32xf32>
    %c0_34 = arith.constant 0 : index
    %c0_35 = arith.constant 0 : index
    %c0_36 = arith.constant 0 : index
    %127 = vector.load %arg8[%c0_34, %c0_35, %c0_36] : memref<1x1x32xf32, #tpu.memory_space<vmem>>, vector<1x1x32xf32>
    %128 = vector.shape_cast %127 : vector<1x1x32xf32> to vector<1x32xf32>
    %129 = vector.broadcast %128 : vector<1x32xf32> to vector<16x32xf32>
    %130 = arith.addf %126, %129 : vector<16x32xf32>
    %131 = arith.addf %130, %3 : vector<16x32xf32>
    %c0_37 = arith.constant 0 : index
    %c0_38 = arith.constant 0 : index
    %c0_39 = arith.constant 0 : index
    %132 = vector.load %arg9[%c0_37, %c0_38, %c0_39] : memref<1x1x32xf32, #tpu.memory_space<vmem>>, vector<1x1x32xf32>
    %133 = vector.shape_cast %132 : vector<1x1x32xf32> to vector<1x32xf32>
    %c0_40 = arith.constant 0 : index
    %c0_41 = arith.constant 0 : index
    %c0_42 = arith.constant 0 : index
    %134 = vector.load %arg10[%c0_40, %c0_41, %c0_42] : memref<1x1x32xf32, #tpu.memory_space<vmem>>, vector<1x1x32xf32>
    %135 = vector.shape_cast %134 : vector<1x1x32xf32> to vector<1x32xf32>
    %cst_43 = arith.constant dense<0.000000e+00> : vector<16xf32>
    %136 = vector.multi_reduction <add>, %131, %cst_43 [1] : vector<16x32xf32> to vector<16xf32>
    %137 = vector.shape_cast %136 : vector<16xf32> to vector<16x1xf32>
    %cst_44 = arith.constant 3.200000e+01 : f32
    %138 = vector.broadcast %cst_44 : f32 to vector<16x1xf32>
    %139 = arith.divf %137, %138 : vector<16x1xf32>
    %140 = vector.broadcast %139 : vector<16x1xf32> to vector<16x32xf32>
    %141 = arith.subf %131, %140 : vector<16x32xf32>
    %142 = arith.mulf %141, %141 : vector<16x32xf32>
    %cst_45 = arith.constant dense<0.000000e+00> : vector<16xf32>
    %143 = vector.multi_reduction <add>, %142, %cst_45 [1] : vector<16x32xf32> to vector<16xf32>
    %144 = vector.shape_cast %143 : vector<16xf32> to vector<16x1xf32>
    %cst_46 = arith.constant 3.200000e+01 : f32
    %145 = vector.broadcast %cst_46 : f32 to vector<16x1xf32>
    %146 = arith.divf %144, %145 : vector<16x1xf32>
    %cst_47 = arith.constant 9.99999996E-13 : f32
    %147 = vector.broadcast %cst_47 : f32 to vector<16x1xf32>
    %148 = arith.addf %146, %147 : vector<16x1xf32>
    %149 = math.rsqrt %148 : vector<16x1xf32>
    %150 = vector.broadcast %149 : vector<16x1xf32> to vector<16x32xf32>
    %151 = arith.mulf %141, %150 : vector<16x32xf32>
    %152 = vector.broadcast %133 : vector<1x32xf32> to vector<16x32xf32>
    %153 = arith.mulf %151, %152 : vector<16x32xf32>
    %154 = vector.broadcast %135 : vector<1x32xf32> to vector<16x32xf32>
    %155 = arith.addf %153, %154 : vector<16x32xf32>
    %156 = arith.truncf %155 : vector<16x32xf32> to vector<16x32xbf16>
    %c0_48 = arith.constant 0 : index
    %c0_49 = arith.constant 0 : index
    %c0_50 = arith.constant 0 : index
    %157 = vector.load %arg11[%c0_48, %c0_49, %c0_50] : memref<1x32x64xbf16, #tpu.memory_space<vmem>>, vector<1x32x64xbf16>
    %158 = vector.shape_cast %157 : vector<1x32x64xbf16> to vector<32x64xbf16>
    %cst_51 = arith.constant dense<0.000000e+00> : vector<16x64xf32>
    %159 = tpu.matmul %156, %158, %cst_51 {dimension_numbers = #tpu.dot_dimension_numbers<[1], [0], [0], [1], [0, 0, 1, 1], [], []>} : vector<16x32xbf16>, vector<32x64xbf16>, vector<16x64xf32> -> vector<16x64xf32>
    %c0_52 = arith.constant 0 : index
    %c0_53 = arith.constant 0 : index
    %c0_54 = arith.constant 0 : index
    %160 = vector.load %arg12[%c0_52, %c0_53, %c0_54] : memref<1x1x64xf32, #tpu.memory_space<vmem>>, vector<1x1x64xf32>
    %161 = vector.shape_cast %160 : vector<1x1x64xf32> to vector<1x64xf32>
    %162 = vector.broadcast %161 : vector<1x64xf32> to vector<16x64xf32>
    %163 = arith.addf %159, %162 : vector<16x64xf32>
    %164 = arith.mulf %163, %163 : vector<16x64xf32>
    %165 = arith.mulf %163, %164 : vector<16x64xf32>
    %cst_55 = arith.constant 4.471500e-02 : f32
    %166 = vector.broadcast %cst_55 : f32 to vector<16x64xf32>
    %167 = arith.mulf %166, %165 : vector<16x64xf32>
    %168 = arith.addf %163, %167 : vector<16x64xf32>
    %cst_56 = arith.constant 0.797884583 : f32
    %169 = vector.broadcast %cst_56 : f32 to vector<16x64xf32>
    %170 = arith.mulf %169, %168 : vector<16x64xf32>
    %171 = math.tanh %170 : vector<16x64xf32>
    %cst_57 = arith.constant 1.000000e+00 : f32
    %172 = vector.broadcast %cst_57 : f32 to vector<16x64xf32>
    %173 = arith.addf %172, %171 : vector<16x64xf32>
    %cst_58 = arith.constant 5.000000e-01 : f32
    %174 = vector.broadcast %cst_58 : f32 to vector<16x64xf32>
    %175 = arith.mulf %174, %173 : vector<16x64xf32>
    %176 = arith.mulf %163, %175 : vector<16x64xf32>
    %177 = arith.truncf %176 : vector<16x64xf32> to vector<16x64xbf16>
    %c0_59 = arith.constant 0 : index
    %c0_60 = arith.constant 0 : index
    %c0_61 = arith.constant 0 : index
    %178 = vector.load %arg13[%c0_59, %c0_60, %c0_61] : memref<1x64x32xbf16, #tpu.memory_space<vmem>>, vector<1x64x32xbf16>
    %179 = vector.shape_cast %178 : vector<1x64x32xbf16> to vector<64x32xbf16>
    %cst_62 = arith.constant dense<0.000000e+00> : vector<16x32xf32>
    %180 = tpu.matmul %177, %179, %cst_62 {dimension_numbers = #tpu.dot_dimension_numbers<[1], [0], [0], [1], [0, 0, 1, 1], [], []>} : vector<16x64xbf16>, vector<64x32xbf16>, vector<16x32xf32> -> vector<16x32xf32>
    %c0_63 = arith.constant 0 : index
    %c0_64 = arith.constant 0 : index
    %c0_65 = arith.constant 0 : index
    %181 = vector.load %arg14[%c0_63, %c0_64, %c0_65] : memref<1x1x32xf32, #tpu.memory_space<vmem>>, vector<1x1x32xf32>
    %182 = vector.shape_cast %181 : vector<1x1x32xf32> to vector<1x32xf32>
    %183 = vector.broadcast %182 : vector<1x32xf32> to vector<16x32xf32>
    %184 = arith.addf %180, %183 : vector<16x32xf32>
    %185 = arith.addf %184, %155 : vector<16x32xf32>
    %c0_66 = arith.constant 0 : index
    %c0_67 = arith.constant 0 : index
    %c0_68 = arith.constant 0 : index
    %186 = vector.load %arg15[%c0_66, %c0_67, %c0_68] : memref<1x1x32xf32, #tpu.memory_space<vmem>>, vector<1x1x32xf32>
    %187 = vector.shape_cast %186 : vector<1x1x32xf32> to vector<1x32xf32>
    %c0_69 = arith.constant 0 : index
    %c0_70 = arith.constant 0 : index
    %c0_71 = arith.constant 0 : index
    %188 = vector.load %arg16[%c0_69, %c0_70, %c0_71] : memref<1x1x32xf32, #tpu.memory_space<vmem>>, vector<1x1x32xf32>
    %189 = vector.shape_cast %188 : vector<1x1x32xf32> to vector<1x32xf32>
    %cst_72 = arith.constant dense<0.000000e+00> : vector<16xf32>
    %190 = vector.multi_reduction <add>, %185, %cst_72 [1] : vector<16x32xf32> to vector<16xf32>
    %191 = vector.shape_cast %190 : vector<16xf32> to vector<16x1xf32>
    %cst_73 = arith.constant 3.200000e+01 : f32
    %192 = vector.broadcast %cst_73 : f32 to vector<16x1xf32>
    %193 = arith.divf %191, %192 : vector<16x1xf32>
    %194 = vector.broadcast %193 : vector<16x1xf32> to vector<16x32xf32>
    %195 = arith.subf %185, %194 : vector<16x32xf32>
    %196 = arith.mulf %195, %195 : vector<16x32xf32>
    %cst_74 = arith.constant dense<0.000000e+00> : vector<16xf32>
    %197 = vector.multi_reduction <add>, %196, %cst_74 [1] : vector<16x32xf32> to vector<16xf32>
    %198 = vector.shape_cast %197 : vector<16xf32> to vector<16x1xf32>
    %cst_75 = arith.constant 3.200000e+01 : f32
    %199 = vector.broadcast %cst_75 : f32 to vector<16x1xf32>
    %200 = arith.divf %198, %199 : vector<16x1xf32>
    %cst_76 = arith.constant 9.99999996E-13 : f32
    %201 = vector.broadcast %cst_76 : f32 to vector<16x1xf32>
    %202 = arith.addf %200, %201 : vector<16x1xf32>
    %203 = math.rsqrt %202 : vector<16x1xf32>
    %204 = vector.broadcast %203 : vector<16x1xf32> to vector<16x32xf32>
    %205 = arith.mulf %195, %204 : vector<16x32xf32>
    %206 = vector.broadcast %187 : vector<1x32xf32> to vector<16x32xf32>
    %207 = arith.mulf %205, %206 : vector<16x32xf32>
    %208 = vector.broadcast %189 : vector<1x32xf32> to vector<16x32xf32>
    %209 = arith.addf %207, %208 : vector<16x32xf32>
    %c0_77 = arith.constant 0 : index
    %c0_78 = arith.constant 0 : index
    %210 = vector.load %arg17[%c0_77, %c0_78] : memref<16x32xf32, #tpu.memory_space<vmem>>, vector<16x32xf32>
    tpu.vector_store %arg17[%c0_77, %c0_78], %209 {strides = array<i32>} : memref<16x32xf32, #tpu.memory_space<vmem>>, vector<16x32xf32>,
    return
  }
  func.func @transform_1(%arg0: i32) -> (i32, i32) {
    %c0_i32 = arith.constant 0 : i32
    %c0_i32_0 = arith.constant 0 : i32
    %c0_i32_1 = arith.constant 0 : i32
    return %c0_i32, %c0_i32_0 : i32, i32
  }
  func.func @transform_2(%arg0: i32) -> (i32, i32) {
    %c0_i32 = arith.constant 0 : i32
    %c0_i32_0 = arith.constant 0 : i32
    %c0_i32_1 = arith.constant 0 : i32
    return %c0_i32, %c0_i32_0 : i32, i32
  }
  func.func @transform_3(%arg0: i32) -> (i32, i32) {
    %c0_i32 = arith.constant 0 : i32
    %c0_i32_0 = arith.constant 0 : i32
    %c0_i32_1 = arith.constant 0 : i32
    return %c0_i32, %c0_i32_0 : i32, i32
  }
  func.func @transform_4(%arg0: i32) -> (i32, i32, i32) {
    %c0_i32 = arith.constant 0 : i32
    %c0_i32_0 = arith.constant 0 : i32
    %c0_i32_1 = arith.constant 0 : i32
    return %arg0, %c0_i32, %c0_i32_0 : i32, i32, i32
  }
  func.func @transform_5(%arg0: i32) -> (i32, i32, i32) {
    %c0_i32 = arith.constant 0 : i32
    %c0_i32_0 = arith.constant 0 : i32
    %c0_i32_1 = arith.constant 0 : i32
    return %arg0, %c0_i32, %c0_i32_0 : i32, i32, i32
  }
  func.func @transform_6(%arg0: i32) -> (i32, i32, i32) {
    %c0_i32 = arith.constant 0 : i32
    %c0_i32_0 = arith.constant 0 : i32
    %c0_i32_1 = arith.constant 0 : i32
    return %arg0, %c0_i32, %c0_i32_0 : i32, i32, i32
  }
  func.func @transform_7(%arg0: i32) -> (i32, i32, i32) {
    %c0_i32 = arith.constant 0 : i32
    %c0_i32_0 = arith.constant 0 : i32
    %c0_i32_1 = arith.constant 0 : i32
    return %arg0, %c0_i32, %c0_i32_0 : i32, i32, i32
  }
  func.func @transform_8(%arg0: i32) -> (i32, i32, i32) {
    %c0_i32 = arith.constant 0 : i32
    %c0_i32_0 = arith.constant 0 : i32
    %c0_i32_1 = arith.constant 0 : i32
    return %arg0, %c0_i32, %c0_i32_0 : i32, i32, i32
  }
  func.func @transform_9(%arg0: i32) -> (i32, i32, i32) {
    %c0_i32 = arith.constant 0 : i32
    %c0_i32_0 = arith.constant 0 : i32
    %c0_i32_1 = arith.constant 0 : i32
    return %arg0, %c0_i32, %c0_i32_0 : i32, i32, i32
  }
  func.func @transform_10(%arg0: i32) -> (i32, i32, i32) {
    %c0_i32 = arith.constant 0 : i32
    %c0_i32_0 = arith.constant 0 : i32
    %c0_i32_1 = arith.constant 0 : i32
    return %arg0, %c0_i32, %c0_i32_0 : i32, i32, i32
  }
  func.func @transform_11(%arg0: i32) -> (i32, i32, i32) {
    %c0_i32 = arith.constant 0 : i32
    %c0_i32_0 = arith.constant 0 : i32
    %c0_i32_1 = arith.constant 0 : i32
    return %arg0, %c0_i32, %c0_i32_0 : i32, i32, i32
  }
  func.func @transform_12(%arg0: i32) -> (i32, i32, i32) {
    %c0_i32 = arith.constant 0 : i32
    %c0_i32_0 = arith.constant 0 : i32
    %c0_i32_1 = arith.constant 0 : i32
    return %arg0, %c0_i32, %c0_i32_0 : i32, i32, i32
  }
  func.func @transform_13(%arg0: i32) -> (i32, i32, i32) {
    %c0_i32 = arith.constant 0 : i32
    %c0_i32_0 = arith.constant 0 : i32
    %c0_i32_1 = arith.constant 0 : i32
    return %arg0, %c0_i32, %c0_i32_0 : i32, i32, i32
  }
  func.func @transform_14(%arg0: i32) -> (i32, i32, i32) {
    %c0_i32 = arith.constant 0 : i32
    %c0_i32_0 = arith.constant 0 : i32
    %c0_i32_1 = arith.constant 0 : i32
    return %arg0, %c0_i32, %c0_i32_0 : i32, i32, i32
  }
  func.func @transform_15(%arg0: i32) -> (i32, i32, i32) {
    %c0_i32 = arith.constant 0 : i32
    %c0_i32_0 = arith.constant 0 : i32
    %c0_i32_1 = arith.constant 0 : i32
    return %arg0, %c0_i32, %c0_i32_0 : i32, i32, i32
  }
  func.func @transform_16(%arg0: i32) -> (i32, i32) {
    %c0_i32 = arith.constant 0 : i32
    %c0_i32_0 = arith.constant 0 : i32
    %c0_i32_1 = arith.constant 0 : i32
    return %c0_i32, %c0_i32_0 : i32, i32
  }
}

</mosaic_0001>

<llo_original>
// kernel: tpu_custom_call.1
$region0: #{tpu_custom_call.1}
  #allocation0 [shape = 'u32[]', space=smem, size = 0x4, offset = 0x4, fixed_abs, tag = 'smem constant byte address 0x4 - core index']
  #allocation1 [shape = 'u32[144,128]{1,0:T(1,128)}', space=vmem, size = 0x12000, scoped, tag = 'internal scratch']
  #allocation2 [shape = 's32[1]{0}', space=sflag, size = 0x4, scoped, tag = 'scratch operand']
  #allocation7 [shape = 's32[]', space=sflag, size = 0x4, offset = 0, fixed_abs, tag = 'sflag constant byte address 0x0 - dummy sync flag']
  #allocation8 [shape = 's32[]', space=sflag, size = 0x4, offset = 0, fixed_abs, tag = 'sflag constant byte address 0x0 - dummy sync flag']
  #allocation9 [shape = 'u32[]', space=smem, size = 0x4, offset = 0x44, fixed_abs, tag = 'smem constant byte address 0x44 - assertion arg 0']
  #allocation10 [shape = 'u32[]', space=smem, size = 0x4, offset = 0x48, fixed_abs, tag = 'smem constant byte address 0x48 - assertion arg 1']
  %s0 = inlined_call_operand.hbm [shape: f32[16,32], index: 0, kind: input, shape index: {}]
  %s1 = inlined_call_operand.vmem [shape: f32[2,8], index: 1, kind: input, shape index: {}]
  %s2 = inlined_call_operand.vmem [shape: f32[1,32], index: 2, kind: input, shape index: {}]
  %s3 = inlined_call_operand.hbm [shape: f32[1,32], index: 3, kind: input, shape index: {}]
  %s4 = inlined_call_operand.vmem [shape: bf16[2,32,96], index: 4, kind: input, shape index: {}]
  %s5 = inlined_call_operand.vmem [shape: f32[2,1,96], index: 5, kind: input, shape index: {}]
  %s6 = inlined_call_operand.vmem [shape: bf16[2,32,32], index: 6, kind: input, shape index: {}]
  %s7 = inlined_call_operand.vmem [shape: f32[2,1,32], index: 7, kind: input, shape index: {}]
  %s8 = inlined_call_operand.vmem [shape: f32[2,1,32], index: 8, kind: input, shape index: {}]
  %s9 = inlined_call_operand.vmem [shape: f32[2,1,32], index: 9, kind: input, shape index: {}]
  %s10 = inlined_call_operand.vmem [shape: bf16[2,32,64], index: 10, kind: input, shape index: {}]
  %s11 = inlined_call_operand.vmem [shape: f32[2,1,64], index: 11, kind: input, shape index: {}]
  %s12 = inlined_call_operand.vmem [shape: bf16[2,64,32], index: 12, kind: input, shape index: {}]
  %s13 = inlined_call_operand.vmem [shape: f32[2,1,32], index: 13, kind: input, shape index: {}]
  %s14 = inlined_call_operand.vmem [shape: f32[2,1,32], index: 14, kind: input, shape index: {}]
  %s15 = inlined_call_operand.vmem [shape: f32[2,1,32], index: 15, kind: input, shape index: {}]
  %s16 = inlined_call_operand.hbm [shape: f32[16,32], index: 16, kind: output, shape index: {}]
  %s17 = sld [smem:[#allocation0]]
  $region105: #{tpu_custom_call.1} parent=0
    _
  %s19 = ssub.s32 1, %s17
  %s20 = scalar_select 0, %s19, %s17
  $region1: #{tpu_custom_call.1} parent=0
    #allocation3 [shape = 'u8[512]{0}', space=vmem, size = 0x400, scoped, tag = 'input window, operand 3, single buffered']
    #allocation4 [shape = 's32[2]{0}', space=sflag, size = 0x8, scoped, tag = 'scoped memory for tpu_custom_call.1']
    #allocation5 [shape = 's32[2]{0}', space=sflag, size = 0x8, scoped, tag = 'scoped memory for tpu_custom_call.1']
    #allocation6 [shape = 'u8[8192]{0}', space=vmem, size = 0x2000, scoped, tag = 'output window, operand 0, single buffered']
    %21 = vsyncpa [#allocation4], 0
    %22 = vsyncpa [#allocation5], 0
    loop: start=0, step=1, limit=4
    $region2: #{tpu_custom_call.1} parent=1 // loop_pre_header
      _
    $region3: #{tpu_custom_call.1} parent=1 // loop_header
      %s24 = sphi 0, %s28
      %p25 = scmp.ge.s32.totalorder %s24, 4
      %s32 = sphi 0, %s32
      %s34 = sphi 0, %s32
      %s35 = sphi 0, %s34
      %s49 = sphi 0, %s35
      %s53 = sphi 0, %s53
      %s55 = sphi 0, %s53
      %s56 = sphi 0, %s55
      %s70 = sphi 0, %s56
      %s74 = sphi 0, %s74
      %s76 = sphi 0, %s74
      %s77 = sphi 0, %s76
      %s91 = sphi 0, %s77
      %s97 = sphi 0, %s99
      %s100 = sphi 0, %s97
      %s101 = sphi 0, %s100
      %s117 = sphi 0, %s101
      %s123 = sphi 0, %s125
      %s126 = sphi 0, %s123
      %s127 = sphi 0, %s126
      %s143 = sphi 0, %s127
      %s149 = sphi 0, %s151
      %s152 = sphi 0, %s149
      %s153 = sphi 0, %s152
      %s169 = sphi 0, %s153
      %s175 = sphi 0, %s177
      %s178 = sphi 0, %s175
      %s179 = sphi 0, %s178
      %s195 = sphi 0, %s179
      %s201 = sphi 0, %s203
      %s204 = sphi 0, %s201
      %s205 = sphi 0, %s204
      %s221 = sphi 0, %s205
      %s227 = sphi 0, %s229
      %s230 = sphi 0, %s227
      %s231 = sphi 0, %s230
      %s247 = sphi 0, %s231
      %s253 = sphi 0, %s255
      %s256 = sphi 0, %s253
      %s257 = sphi 0, %s256
      %s273 = sphi 0, %s257
      %s279 = sphi 0, %s281
      %s282 = sphi 0, %s279
      %s283 = sphi 0, %s282
      %s299 = sphi 0, %s283
      %s305 = sphi 0, %s307
      %s308 = sphi 0, %s305
      %s309 = sphi 0, %s308
      %s325 = sphi 0, %s309
      %s331 = sphi 0, %s333
      %s334 = sphi 0, %s331
      %s335 = sphi 0, %s334
      %s351 = sphi 0, %s335
      %s357 = sphi 0, %s359
      %s360 = sphi 0, %s357
      %s361 = sphi 0, %s360
      %s377 = sphi 0, %s361
      %s383 = sphi 0, %s385
      %s386 = sphi 0, %s383
      %s387 = sphi 0, %s386
      %s403 = sphi 0, %s387
      %s407 = sphi 0, %s407
      %s409 = sphi 0, %s407
      %s410 = sphi 0, %s409
      %s424 = sphi 0, %s410
    $region4: #{tpu_custom_call.1} parent=1 // loop_header_branch
      %27 = sbr.rel (%p25) target = $region8
    $region5: #{tpu_custom_call.1} parent=1 // loop_body
      %s29 = ssub.s32 %s24, 1
      %s30 = ssub.s32 %s24, 2
      %s31 = sadd.s32 %s24, 1
      %s33 = sadd.s32 %s32, 1
      %p36 = scmp.eq.s32.totalorder %s24, 1
      %p37 = scmp.ne.s32.totalorder %s32, %s34
      %p38 = scmp.eq.s32.totalorder %s24, 0
      %p39 = por %p37, %p38
      %p40 = scmp.ne.s32.totalorder %s32, %s34
      %p41 = scmp.eq.s32.totalorder %s29, 1
      %p42 = por %p40, %p41
      %p43 = scmp.ne.s32.totalorder %s34, %s35
      %p44 = scmp.eq.s32.totalorder %s29, 0
      %p45 = por %p43, %p44
      %p46 = scmp.ne.s32.totalorder %s34, %s35
      %p47 = scmp.eq.s32.totalorder %s30, 1
      %p48 = por %p46, %p47
      %p50 = scmp.ne.s32.totalorder %s35, %s49
      %p51 = scmp.eq.s32.totalorder %s30, 0
      %p52 = por %p50, %p51
      %s54 = sadd.s32 %s53, 1
      %p57 = scmp.eq.s32.totalorder %s24, 1
      %p58 = scmp.ne.s32.totalorder %s53, %s55
      %p59 = scmp.eq.s32.totalorder %s24, 0
      %p60 = por %p58, %p59
      %p61 = scmp.ne.s32.totalorder %s53, %s55
      %p62 = scmp.eq.s32.totalorder %s29, 1
      %p63 = por %p61, %p62
      %p64 = scmp.ne.s32.totalorder %s55, %s56
      %p65 = scmp.eq.s32.totalorder %s29, 0
      %p66 = por %p64, %p65
      %p67 = scmp.ne.s32.totalorder %s55, %s56
      %p68 = scmp.eq.s32.totalorder %s30, 1
      %p69 = por %p67, %p68
      %p71 = scmp.ne.s32.totalorder %s56, %s70
      %p72 = scmp.eq.s32.totalorder %s30, 0
      %p73 = por %p71, %p72
      %s75 = sadd.s32 %s74, 1
      %p78 = scmp.eq.s32.totalorder %s24, 1
      %p79 = scmp.ne.s32.totalorder %s74, %s76
      %p80 = scmp.eq.s32.totalorder %s24, 0
      %p81 = por %p79, %p80
      %p82 = scmp.ne.s32.totalorder %s74, %s76
      %p83 = scmp.eq.s32.totalorder %s29, 1
      %p84 = por %p82, %p83
      %p85 = scmp.ne.s32.totalorder %s76, %s77
      %p86 = scmp.eq.s32.totalorder %s29, 0
      %p87 = por %p85, %p86
      %p88 = scmp.ne.s32.totalorder %s76, %s77
      %p89 = scmp.eq.s32.totalorder %s30, 1
      %p90 = por %p88, %p89
      %p92 = scmp.ne.s32.totalorder %s77, %s91
      %p93 = scmp.eq.s32.totalorder %s30, 0
      %p94 = por %p92, %p93
      %s95 = ssub.s32 %s24, %s31
      %p96 = scmp.eq.s32.totalorder %s95, 0
      %s98 = sadd.s32 %s97, 1
      %s99 = scalar_select %p96, %s97, %s98
      %p102 = pneg %p96
      %p103 = scmp.eq.s32.totalorder %s24, 1
      %p104 = por %p102, %p103
      %p105 = scmp.ne.s32.totalorder %s97, %s100
      %p106 = scmp.eq.s32.totalorder %s24, 0
      %p107 = por %p105, %p106
      %p108 = scmp.ne.s32.totalorder %s97, %s100
      %p109 = scmp.eq.s32.totalorder %s29, 1
      %p110 = por %p108, %p109
      %p111 = scmp.ne.s32.totalorder %s100, %s101
      %p112 = scmp.eq.s32.totalorder %s29, 0
      %p113 = por %p111, %p112
      %p114 = scmp.ne.s32.totalorder %s100, %s101
      %p115 = scmp.eq.s32.totalorder %s30, 1
      %p116 = por %p114, %p115
      %p118 = scmp.ne.s32.totalorder %s101, %s117
      %p119 = scmp.eq.s32.totalorder %s30, 0
      %p120 = por %p118, %p119
      %s121 = ssub.s32 %s24, %s31
      %p122 = scmp.eq.s32.totalorder %s121, 0
      %s124 = sadd.s32 %s123, 1
      %s125 = scalar_select %p122, %s123, %s124
      %p128 = pneg %p122
      %p129 = scmp.eq.s32.totalorder %s24, 1
      %p130 = por %p128, %p129
      %p131 = scmp.ne.s32.totalorder %s123, %s126
      %p132 = scmp.eq.s32.totalorder %s24, 0
      %p133 = por %p131, %p132
      %p134 = scmp.ne.s32.totalorder %s123, %s126
      %p135 = scmp.eq.s32.totalorder %s29, 1
      %p136 = por %p134, %p135
      %p137 = scmp.ne.s32.totalorder %s126, %s127
      %p138 = scmp.eq.s32.totalorder %s29, 0
      %p139 = por %p137, %p138
      %p140 = scmp.ne.s32.totalorder %s126, %s127
      %p141 = scmp.eq.s32.totalorder %s30, 1
      %p142 = por %p140, %p141
      %p144 = scmp.ne.s32.totalorder %s127, %s143
      %p145 = scmp.eq.s32.totalorder %s30, 0
      %p146 = por %p144, %p145
      %s147 = ssub.s32 %s24, %s31
      %p148 = scmp.eq.s32.totalorder %s147, 0
      %s150 = sadd.s32 %s149, 1
      %s151 = scalar_select %p148, %s149, %s150
      %p154 = pneg %p148
      %p155 = scmp.eq.s32.totalorder %s24, 1
      %p156 = por %p154, %p155
      %p157 = scmp.ne.s32.totalorder %s149, %s152
      %p158 = scmp.eq.s32.totalorder %s24, 0
      %p159 = por %p157, %p158
      %p160 = scmp.ne.s32.totalorder %s149, %s152
      %p161 = scmp.eq.s32.totalorder %s29, 1
      %p162 = por %p160, %p161
      %p163 = scmp.ne.s32.totalorder %s152, %s153
      %p164 = scmp.eq.s32.totalorder %s29, 0
      %p165 = por %p163, %p164
      %p166 = scmp.ne.s32.totalorder %s152, %s153
      %p167 = scmp.eq.s32.totalorder %s30, 1
      %p168 = por %p166, %p167
      %p170 = scmp.ne.s32.totalorder %s153, %s169
      %p171 = scmp.eq.s32.totalorder %s30, 0
      %p172 = por %p170, %p171
      %s173 = ssub.s32 %s24, %s31
      %p174 = scmp.eq.s32.totalorder %s173, 0
      %s176 = sadd.s32 %s175, 1
      %s177 = scalar_select %p174, %s175, %s176
      %p180 = pneg %p174
      %p181 = scmp.eq.s32.totalorder %s24, 1
      %p182 = por %p180, %p181
      %p183 = scmp.ne.s32.totalorder %s175, %s178
      %p184 = scmp.eq.s32.totalorder %s24, 0
      %p185 = por %p183, %p184
      %p186 = scmp.ne.s32.totalorder %s175, %s178
      %p187 = scmp.eq.s32.totalorder %s29, 1
      %p188 = por %p186, %p187
      %p189 = scmp.ne.s32.totalorder %s178, %s179
      %p190 = scmp.eq.s32.totalorder %s29, 0
      %p191 = por %p189, %p190
      %p192 = scmp.ne.s32.totalorder %s178, %s179
      %p193 = scmp.eq.s32.totalorder %s30, 1
      %p194 = por %p192, %p193
      %p196 = scmp.ne.s32.totalorder %s179, %s195
      %p197 = scmp.eq.s32.totalorder %s30, 0
      %p198 = por %p196, %p197
      %s199 = ssub.s32 %s24, %s31
      %p200 = scmp.eq.s32.totalorder %s199, 0
      %s202 = sadd.s32 %s201, 1
      %s203 = scalar_select %p200, %s201, %s202
      %p206 = pneg %p200
      %p207 = scmp.eq.s32.totalorder %s24, 1
      %p208 = por %p206, %p207
      %p209 = scmp.ne.s32.totalorder %s201, %s204
      %p210 = scmp.eq.s32.totalorder %s24, 0
      %p211 = por %p209, %p210
      %p212 = scmp.ne.s32.totalorder %s201, %s204
      %p213 = scmp.eq.s32.totalorder %s29, 1
      %p214 = por %p212, %p213
      %p215 = scmp.ne.s32.totalorder %s204, %s205
      %p216 = scmp.eq.s32.totalorder %s29, 0
      %p217 = por %p215, %p216
      %p218 = scmp.ne.s32.totalorder %s204, %s205
      %p219 = scmp.eq.s32.totalorder %s30, 1
      %p220 = por %p218, %p219
      %p222 = scmp.ne.s32.totalorder %s205, %s221
      %p223 = scmp.eq.s32.totalorder %s30, 0
      %p224 = por %p222, %p223
      %s225 = ssub.s32 %s24, %s31
      %p226 = scmp.eq.s32.totalorder %s225, 0
      %s228 = sadd.s32 %s227, 1
      %s229 = scalar_select %p226, %s227, %s228
      %p232 = pneg %p226
      %p233 = scmp.eq.s32.totalorder %s24, 1
      %p234 = por %p232, %p233
      %p235 = scmp.ne.s32.totalorder %s227, %s230
      %p236 = scmp.eq.s32.totalorder %s24, 0
      %p237 = por %p235, %p236
      %p238 = scmp.ne.s32.totalorder %s227, %s230
      %p239 = scmp.eq.s32.totalorder %s29, 1
      %p240 = por %p238, %p239
      %p241 = scmp.ne.s32.totalorder %s230, %s231
      %p242 = scmp.eq.s32.totalorder %s29, 0
      %p243 = por %p241, %p242
      %p244 = scmp.ne.s32.totalorder %s230, %s231
      %p245 = scmp.eq.s32.totalorder %s30, 1
      %p246 = por %p244, %p245
      %p248 = scmp.ne.s32.totalorder %s231, %s247
      %p249 = scmp.eq.s32.totalorder %s30, 0
      %p250 = por %p248, %p249
      %s251 = ssub.s32 %s24, %s31
      %p252 = scmp.eq.s32.totalorder %s251, 0
      %s254 = sadd.s32 %s253, 1
      %s255 = scalar_select %p252, %s253, %s254
      %p258 = pneg %p252
      %p259 = scmp.eq.s32.totalorder %s24, 1
      %p260 = por %p258, %p259
      %p261 = scmp.ne.s32.totalorder %s253, %s256
      %p262 = scmp.eq.s32.totalorder %s24, 0
      %p263 = por %p261, %p262
      %p264 = scmp.ne.s32.totalorder %s253, %s256
      %p265 = scmp.eq.s32.totalorder %s29, 1
      %p266 = por %p264, %p265
      %p267 = scmp.ne.s32.totalorder %s256, %s257
      %p268 = scmp.eq.s32.totalorder %s29, 0
      %p269 = por %p267, %p268
      %p270 = scmp.ne.s32.totalorder %s256, %s257
      %p271 = scmp.eq.s32.totalorder %s30, 1
      %p272 = por %p270, %p271
      %p274 = scmp.ne.s32.totalorder %s257, %s273
      %p275 = scmp.eq.s32.totalorder %s30, 0
      %p276 = por %p274, %p275
      %s277 = ssub.s32 %s24, %s31
      %p278 = scmp.eq.s32.totalorder %s277, 0
      %s280 = sadd.s32 %s279, 1
      %s281 = scalar_select %p278, %s279, %s280
      %p284 = pneg %p278
      %p285 = scmp.eq.s32.totalorder %s24, 1
      %p286 = por %p284, %p285
      %p287 = scmp.ne.s32.totalorder %s279, %s282
      %p288 = scmp.eq.s32.totalorder %s24, 0
      %p289 = por %p287, %p288
      %p290 = scmp.ne.s32.totalorder %s279, %s282
      %p291 = scmp.eq.s32.totalorder %s29, 1
      %p292 = por %p290, %p291
      %p293 = scmp.ne.s32.totalorder %s282, %s283
      %p294 = scmp.eq.s32.totalorder %s29, 0
      %p295 = por %p293, %p294
      %p296 = scmp.ne.s32.totalorder %s282, %s283
      %p297 = scmp.eq.s32.totalorder %s30, 1
      %p298 = por %p296, %p297
      %p300 = scmp.ne.s32.totalorder %s283, %s299
      %p301 = scmp.eq.s32.totalorder %s30, 0
      %p302 = por %p300, %p301
      %s303 = ssub.s32 %s24, %s31
      %p304 = scmp.eq.s32.totalorder %s303, 0
      %s306 = sadd.s32 %s305, 1
      %s307 = scalar_select %p304, %s305, %s306
      %p310 = pneg %p304
      %p311 = scmp.eq.s32.totalorder %s24, 1
      %p312 = por %p310, %p311
      %p313 = scmp.ne.s32.totalorder %s305, %s308
      %p314 = scmp.eq.s32.totalorder %s24, 0
      %p315 = por %p313, %p314
      %p316 = scmp.ne.s32.totalorder %s305, %s308
      %p317 = scmp.eq.s32.totalorder %s29, 1
      %p318 = por %p316, %p317
      %p319 = scmp.ne.s32.totalorder %s308, %s309
      %p320 = scmp.eq.s32.totalorder %s29, 0
      %p321 = por %p319, %p320
      %p322 = scmp.ne.s32.totalorder %s308, %s309
      %p323 = scmp.eq.s32.totalorder %s30, 1
      %p324 = por %p322, %p323
      %p326 = scmp.ne.s32.totalorder %s309, %s325
      %p327 = scmp.eq.s32.totalorder %s30, 0
      %p328 = por %p326, %p327
      %s329 = ssub.s32 %s24, %s31
      %p330 = scmp.eq.s32.totalorder %s329, 0
      %s332 = sadd.s32 %s331, 1
      %s333 = scalar_select %p330, %s331, %s332
      %p336 = pneg %p330
      %p337 = scmp.eq.s32.totalorder %s24, 1
      %p338 = por %p336, %p337
      %p339 = scmp.ne.s32.totalorder %s331, %s334
      %p340 = scmp.eq.s32.totalorder %s24, 0
      %p341 = por %p339, %p340
      %p342 = scmp.ne.s32.totalorder %s331, %s334
      %p343 = scmp.eq.s32.totalorder %s29, 1
      %p344 = por %p342, %p343
      %p345 = scmp.ne.s32.totalorder %s334, %s335
      %p346 = scmp.eq.s32.totalorder %s29, 0
      %p347 = por %p345, %p346
      %p348 = scmp.ne.s32.totalorder %s334, %s335
      %p349 = scmp.eq.s32.totalorder %s30, 1
      %p350 = por %p348, %p349
      %p352 = scmp.ne.s32.totalorder %s335, %s351
      %p353 = scmp.eq.s32.totalorder %s30, 0
      %p354 = por %p352, %p353
      %s355 = ssub.s32 %s24, %s31
      %p356 = scmp.eq.s32.totalorder %s355, 0
      %s358 = sadd.s32 %s357, 1
      %s359 = scalar_select %p356, %s357, %s358
      %p362 = pneg %p356
      %p363 = scmp.eq.s32.totalorder %s24, 1
      %p364 = por %p362, %p363
      %p365 = scmp.ne.s32.totalorder %s357, %s360
      %p366 = scmp.eq.s32.totalorder %s24, 0
      %p367 = por %p365, %p366
      %p368 = scmp.ne.s32.totalorder %s357, %s360
      %p369 = scmp.eq.s32.totalorder %s29, 1
      %p370 = por %p368, %p369
      %p371 = scmp.ne.s32.totalorder %s360, %s361
      %p372 = scmp.eq.s32.totalorder %s29, 0
      %p373 = por %p371, %p372
      %p374 = scmp.ne.s32.totalorder %s360, %s361
      %p375 = scmp.eq.s32.totalorder %s30, 1
      %p376 = por %p374, %p375
      %p378 = scmp.ne.s32.totalorder %s361, %s377
      %p379 = scmp.eq.s32.totalorder %s30, 0
      %p380 = por %p378, %p379
      %s381 = ssub.s32 %s24, %s31
      %p382 = scmp.eq.s32.totalorder %s381, 0
      %s384 = sadd.s32 %s383, 1
      %s385 = scalar_select %p382, %s383, %s384
      %p388 = pneg %p382
      %p389 = scmp.eq.s32.totalorder %s24, 1
      %p390 = por %p388, %p389
      %p391 = scmp.ne.s32.totalorder %s383, %s386
      %p392 = scmp.eq.s32.totalorder %s24, 0
      %p393 = por %p391, %p392
      %p394 = scmp.ne.s32.totalorder %s383, %s386
      %p395 = scmp.eq.s32.totalorder %s29, 1
      %p396 = por %p394, %p395
      %p397 = scmp.ne.s32.totalorder %s386, %s387
      %p398 = scmp.eq.s32.totalorder %s29, 0
      %p399 = por %p397, %p398
      %p400 = scmp.ne.s32.totalorder %s386, %s387
      %p401 = scmp.eq.s32.totalorder %s30, 1
      %p402 = por %p400, %p401
      %p404 = scmp.ne.s32.totalorder %s387, %s403
      %p405 = scmp.eq.s32.totalorder %s30, 0
      %p406 = por %p404, %p405
      %s408 = sadd.s32 %s407, 1
      %p411 = scmp.eq.s32.totalorder %s24, 1
      %p412 = scmp.ne.s32.totalorder %s407, %s409
      %p413 = scmp.eq.s32.totalorder %s24, 0
      %p414 = por %p412, %p413
      %p415 = scmp.ne.s32.totalorder %s407, %s409
      %p416 = scmp.eq.s32.totalorder %s29, 1
      %p417 = por %p415, %p416
      %p418 = scmp.ne.s32.totalorder %s409, %s410
      %p419 = scmp.eq.s32.totalorder %s29, 0
      %p420 = por %p418, %p419
      %p421 = scmp.ne.s32.totalorder %s409, %s410
      %p422 = scmp.eq.s32.totalorder %s30, 1
      %p423 = por %p421, %p422
      %p425 = scmp.ne.s32.totalorder %s410, %s424
      %p426 = scmp.eq.s32.totalorder %s30, 0
      %p427 = por %p425, %p426
      %p428 = scmp.le.s32.totalorder 1, %s24
      %p429 = scmp.lt.s32.totalorder %s24, 3
      %p430 = pnand %p428, %p429
      %p431 = pneg %p430
      // Predicated region
      $region9: #{tpu_custom_call.1} parent=5 // pred_check
        _
      $region10: #{tpu_custom_call.1} parent=5 // pred_check_branch
        %433 = sbr.rel (%p430) target = $region12
      $region11: #{tpu_custom_call.1} parent=5 // pred_region
        %s434 = ssub.s32 %s24, 1
        // Predicated region
        $region13: #{tpu_custom_call.1} parent=11 // pred_check
          %p435 = pneg %p45
        $region14: #{tpu_custom_call.1} parent=11 // pred_check_branch
          %437 = sbr.rel (%p435) target = $region16
        $region15: #{tpu_custom_call.1} parent=11 // pred_region
          _
        $region16: #{tpu_custom_call.1} parent=11 // pred_fallthru
          _
        // Predicated region
        $region17: #{tpu_custom_call.1} parent=11 // pred_check
          %p438 = pneg %p66
        $region18: #{tpu_custom_call.1} parent=11 // pred_check_branch
          %440 = sbr.rel (%p438) target = $region20
        $region19: #{tpu_custom_call.1} parent=11 // pred_region
          _
        $region20: #{tpu_custom_call.1} parent=11 // pred_fallthru
          _
        // Predicated region
        $region21: #{tpu_custom_call.1} parent=11 // pred_check
          %p441 = pneg %p87
        $region22: #{tpu_custom_call.1} parent=11 // pred_check_branch
          %443 = sbr.rel (%p441) target = $region24
        $region23: #{tpu_custom_call.1} parent=11 // pred_region
          %s445 = ssub.s32 16, 16
          %446 = vsyncadd [#allocation4], %s445
          %s448 = sshll.u32 [#allocation3], 4
          %s449 = int_to_ptr.vmem [resolvable:$true] %s448
          %451 = dma.hbm_to_vmem [thread:$0]  %s3, 16, %s449, [#allocation4]
        $region24: #{tpu_custom_call.1} parent=11 // pred_fallthru
          _
      $region12: #{tpu_custom_call.1} parent=5 // pred_fallthru
        _
      %p452 = scmp.lt.s32.totalorder %s24, 2
      // Predicated region
      $region25: #{tpu_custom_call.1} parent=5 // pred_check
        %p453 = pneg %p452
      $region26: #{tpu_custom_call.1} parent=5 // pred_check_branch
        %455 = sbr.rel (%p453) target = $region28
      $region27: #{tpu_custom_call.1} parent=5 // pred_region
        // Predicated region
        $region29: #{tpu_custom_call.1} parent=27 // pred_check
          %p456 = pneg %p107
        $region30: #{tpu_custom_call.1} parent=27 // pred_check_branch
          %458 = sbr.rel (%p456) target = $region32
        $region31: #{tpu_custom_call.1} parent=27 // pred_region
          %p459 = scmp.lt.s32.totalorder %s24, 1
          %s460 = scalar_select %p459, %s24, 1
          %s461 = smul.addr %s460, 4
          %s462 = smul.addr %s461, 4
          %s463 = scalar_lea.vmem %s4, %s462
        $region32: #{tpu_custom_call.1} parent=27 // pred_fallthru
          _
        // Predicated region
        $region33: #{tpu_custom_call.1} parent=27 // pred_check
          %p464 = pneg %p133
        $region34: #{tpu_custom_call.1} parent=27 // pred_check_branch
          %466 = sbr.rel (%p464) target = $region36
        $region35: #{tpu_custom_call.1} parent=27 // pred_region
          %p467 = scmp.lt.s32.totalorder %s24, 1
          %s468 = scalar_select %p467, %s24, 1
          %s469 = scalar_lea.vmem %s5, %s468
        $region36: #{tpu_custom_call.1} parent=27 // pred_fallthru
          _
        // Predicated region
        $region37: #{tpu_custom_call.1} parent=27 // pred_check
          %p470 = pneg %p159
        $region38: #{tpu_custom_call.1} parent=27 // pred_check_branch
          %472 = sbr.rel (%p470) target = $region40
        $region39: #{tpu_custom_call.1} parent=27 // pred_region
          %p473 = scmp.lt.s32.totalorder %s24, 1
          %s474 = scalar_select %p473, %s24, 1
          %s475 = smul.addr %s474, 4
          %s476 = smul.addr %s475, 4
          %s477 = scalar_lea.vmem %s6, %s476
        $region40: #{tpu_custom_call.1} parent=27 // pred_fallthru
          _
        // Predicated region
        $region41: #{tpu_custom_call.1} parent=27 // pred_check
          %p478 = pneg %p185
        $region42: #{tpu_custom_call.1} parent=27 // pred_check_branch
          %480 = sbr.rel (%p478) target = $region44
        $region43: #{tpu_custom_call.1} parent=27 // pred_region
          %p481 = scmp.lt.s32.totalorder %s24, 1
          %s482 = scalar_select %p481, %s24, 1
          %s483 = scalar_lea.vmem %s7, %s482
        $region44: #{tpu_custom_call.1} parent=27 // pred_fallthru
          _
        // Predicated region
        $region45: #{tpu_custom_call.1} parent=27 // pred_check
          %p484 = pneg %p211
        $region46: #{tpu_custom_call.1} parent=27 // pred_check_branch
          %486 = sbr.rel (%p484) target = $region48
        $region47: #{tpu_custom_call.1} parent=27 // pred_region
          %p487 = scmp.lt.s32.totalorder %s24, 1
          %s488 = scalar_select %p487, %s24, 1
          %s489 = scalar_lea.vmem %s8, %s488
        $region48: #{tpu_custom_call.1} parent=27 // pred_fallthru
          _
        // Predicated region
        $region49: #{tpu_custom_call.1} parent=27 // pred_check
          %p490 = pneg %p237
        $region50: #{tpu_custom_call.1} parent=27 // pred_check_branch
          %492 = sbr.rel (%p490) target = $region52
        $region51: #{tpu_custom_call.1} parent=27 // pred_region
          %p493 = scmp.lt.s32.totalorder %s24, 1
          %s494 = scalar_select %p493, %s24, 1
          %s495 = scalar_lea.vmem %s9, %s494
        $region52: #{tpu_custom_call.1} parent=27 // pred_fallthru
          _
        // Predicated region
        $region53: #{tpu_custom_call.1} parent=27 // pred_check
          %p496 = pneg %p263
        $region54: #{tpu_custom_call.1} parent=27 // pred_check_branch
          %498 = sbr.rel (%p496) target = $region56
        $region55: #{tpu_custom_call.1} parent=27 // pred_region
          %p499 = scmp.lt.s32.totalorder %s24, 1
          %s500 = scalar_select %p499, %s24, 1
          %s501 = smul.addr %s500, 4
          %s502 = smul.addr %s501, 4
          %s503 = scalar_lea.vmem %s10, %s502
        $region56: #{tpu_custom_call.1} parent=27 // pred_fallthru
          _
        // Predicated region
        $region57: #{tpu_custom_call.1} parent=27 // pred_check
          %p504 = pneg %p289
        $region58: #{tpu_custom_call.1} parent=27 // pred_check_branch
          %506 = sbr.rel (%p504) target = $region60
        $region59: #{tpu_custom_call.1} parent=27 // pred_region
          %p507 = scmp.lt.s32.totalorder %s24, 1
          %s508 = scalar_select %p507, %s24, 1
          %s509 = scalar_lea.vmem %s11, %s508
        $region60: #{tpu_custom_call.1} parent=27 // pred_fallthru
          _
        // Predicated region
        $region61: #{tpu_custom_call.1} parent=27 // pred_check
          %p510 = pneg %p315
        $region62: #{tpu_custom_call.1} parent=27 // pred_check_branch
          %512 = sbr.rel (%p510) target = $region64
        $region63: #{tpu_custom_call.1} parent=27 // pred_region
          %p513 = scmp.lt.s32.totalorder %s24, 1
          %s514 = scalar_select %p513, %s24, 1
          %s515 = smul.addr %s514, 8
          %s516 = smul.addr %s515, 4
          %s517 = scalar_lea.vmem %s12, %s516
        $region64: #{tpu_custom_call.1} parent=27 // pred_fallthru
          _
        // Predicated region
        $region65: #{tpu_custom_call.1} parent=27 // pred_check
          %p518 = pneg %p341
        $region66: #{tpu_custom_call.1} parent=27 // pred_check_branch
          %520 = sbr.rel (%p518) target = $region68
        $region67: #{tpu_custom_call.1} parent=27 // pred_region
          %p521 = scmp.lt.s32.totalorder %s24, 1
          %s522 = scalar_select %p521, %s24, 1
          %s523 = scalar_lea.vmem %s13, %s522
        $region68: #{tpu_custom_call.1} parent=27 // pred_fallthru
          _
        // Predicated region
        $region69: #{tpu_custom_call.1} parent=27 // pred_check
          %p524 = pneg %p367
        $region70: #{tpu_custom_call.1} parent=27 // pred_check_branch
          %526 = sbr.rel (%p524) target = $region72
        $region71: #{tpu_custom_call.1} parent=27 // pred_region
          %p527 = scmp.lt.s32.totalorder %s24, 1
          %s528 = scalar_select %p527, %s24, 1
          %s529 = scalar_lea.vmem %s14, %s528
        $region72: #{tpu_custom_call.1} parent=27 // pred_fallthru
          _
        // Predicated region
        $region73: #{tpu_custom_call.1} parent=27 // pred_check
          %p530 = pneg %p393
        $region74: #{tpu_custom_call.1} parent=27 // pred_check_branch
          %532 = sbr.rel (%p530) target = $region76
        $region75: #{tpu_custom_call.1} parent=27 // pred_region
          %p533 = scmp.lt.s32.totalorder %s24, 1
          %s534 = scalar_select %p533, %s24, 1
          %s535 = scalar_lea.vmem %s15, %s534
        $region76: #{tpu_custom_call.1} parent=27 // pred_fallthru
          _
      $region28: #{tpu_custom_call.1} parent=5 // pred_fallthru
        _
      %p536 = scmp.le.s32.totalorder 1, %s24
      %p537 = scmp.lt.s32.totalorder %s24, 3
      %p538 = pnand %p536, %p537
      %p539 = pneg %p538
      // Predicated region
      $region77: #{tpu_custom_call.1} parent=5 // pred_check
        _
      $region78: #{tpu_custom_call.1} parent=5 // pred_check_branch
        %541 = sbr.rel (%p538) target = $region80
      $region79: #{tpu_custom_call.1} parent=5 // pred_region
        %s542 = ssub.s32 %s24, 1
        // Predicated region
        $region81: #{tpu_custom_call.1} parent=79 // pred_check
          %p543 = pneg %p87
        $region82: #{tpu_custom_call.1} parent=79 // pred_check_branch
          %545 = sbr.rel (%p543) target = $region84
        $region83: #{tpu_custom_call.1} parent=79 // pred_region
          %546 = dma.done [#allocation4], 16
        $region84: #{tpu_custom_call.1} parent=79 // pred_fallthru
          _
        %p547 = pneg %p45
        %p548 = pneg %p42
        %p549 = pneg %p66
        %p550 = pneg %p63
        %p551 = pneg %p87
        %p552 = pneg %p84
        %p553 = scmp.lt.s32.totalorder %s29, 1
        %s554 = scalar_select %p553, %s29, 1
        %s555 = smul.addr %s554, 4
        %s556 = smul.addr %s555, 4
        %s557 = scalar_lea.vmem %s4, %s556
        %p558 = pneg %p113
        %p559 = pneg %p110
        %p560 = scmp.lt.s32.totalorder %s29, 1
        %s561 = scalar_select %p560, %s29, 1
        %s562 = scalar_lea.vmem %s5, %s561
        %p563 = pneg %p139
        %p564 = pneg %p136
        %p565 = scmp.lt.s32.totalorder %s29, 1
        %s566 = scalar_select %p565, %s29, 1
        %s567 = smul.addr %s566, 4
        %s568 = smul.addr %s567, 4
        %s569 = scalar_lea.vmem %s6, %s568
        %p570 = pneg %p165
        %p571 = pneg %p162
        %p572 = scmp.lt.s32.totalorder %s29, 1
        %s573 = scalar_select %p572, %s29, 1
        %s574 = scalar_lea.vmem %s7, %s573
        %p575 = pneg %p191
        %p576 = pneg %p188
        %p577 = scmp.lt.s32.totalorder %s29, 1
        %s578 = scalar_select %p577, %s29, 1
        %s579 = scalar_lea.vmem %s8, %s578
        %p580 = pneg %p217
        %p581 = pneg %p214
        %p582 = scmp.lt.s32.totalorder %s29, 1
        %s583 = scalar_select %p582, %s29, 1
        %s584 = scalar_lea.vmem %s9, %s583
        %p585 = pneg %p243
        %p586 = pneg %p240
        %p587 = scmp.lt.s32.totalorder %s29, 1
        %s588 = scalar_select %p587, %s29, 1
        %s589 = smul.addr %s588, 4
        %s590 = smul.addr %s589, 4
        %s591 = scalar_lea.vmem %s10, %s590
        %p592 = pneg %p269
        %p593 = pneg %p266
        %p594 = scmp.lt.s32.totalorder %s29, 1
        %s595 = scalar_select %p594, %s29, 1
        %s596 = scalar_lea.vmem %s11, %s595
        %p597 = pneg %p295
        %p598 = pneg %p292
        %p599 = scmp.lt.s32.totalorder %s29, 1
        %s600 = scalar_select %p599, %s29, 1
        %s601 = smul.addr %s600, 8
        %s602 = smul.addr %s601, 4
        %s603 = scalar_lea.vmem %s12, %s602
        %p604 = pneg %p321
        %p605 = pneg %p318
        %p606 = scmp.lt.s32.totalorder %s29, 1
        %s607 = scalar_select %p606, %s29, 1
        %s608 = scalar_lea.vmem %s13, %s607
        %p609 = pneg %p347
        %p610 = pneg %p344
        %p611 = scmp.lt.s32.totalorder %s29, 1
        %s612 = scalar_select %p611, %s29, 1
        %s613 = scalar_lea.vmem %s14, %s612
        %p614 = pneg %p373
        %p615 = pneg %p370
        %p616 = scmp.lt.s32.totalorder %s29, 1
        %s617 = scalar_select %p616, %s29, 1
        %s618 = scalar_lea.vmem %s15, %s617
        %p619 = pneg %p399
        %p620 = pneg %p396
        %p621 = pneg %p420
        %p622 = pneg %p417
        %p623 = scmp.lt.s32.totalorder %s29, 1
        %s624 = scalar_select %p623, %s29, 1
        %s625 = smul.addr %s624, 4
        %s626 = smul.addr %s625, 4
        %s627 = scalar_lea.vmem %s4, %s626
        %p628 = scmp.lt.s32.totalorder %s29, 1
        %s629 = scalar_select %p628, %s29, 1
        %s630 = scalar_lea.vmem %s5, %s629
        %p631 = scmp.lt.s32.totalorder %s29, 1
        %s632 = scalar_select %p631, %s29, 1
        %s633 = smul.addr %s632, 4
        %s634 = smul.addr %s633, 4
        %s635 = scalar_lea.vmem %s6, %s634
        %p636 = scmp.lt.s32.totalorder %s29, 1
        %s637 = scalar_select %p636, %s29, 1
        %s638 = scalar_lea.vmem %s7, %s637
        %p639 = scmp.lt.s32.totalorder %s29, 1
        %s640 = scalar_select %p639, %s29, 1
        %s641 = scalar_lea.vmem %s8, %s640
        %p642 = scmp.lt.s32.totalorder %s29, 1
        %s643 = scalar_select %p642, %s29, 1
        %s644 = scalar_lea.vmem %s9, %s643
        %p645 = scmp.lt.s32.totalorder %s29, 1
        %s646 = scalar_select %p645, %s29, 1
        %s647 = smul.addr %s646, 4
        %s648 = smul.addr %s647, 4
        %s649 = scalar_lea.vmem %s10, %s648
        %p650 = scmp.lt.s32.totalorder %s29, 1
        %s651 = scalar_select %p650, %s29, 1
        %s652 = scalar_lea.vmem %s11, %s651
        %p653 = scmp.lt.s32.totalorder %s29, 1
        %s654 = scalar_select %p653, %s29, 1
        %s655 = smul.addr %s654, 8
        %s656 = smul.addr %s655, 4
        %s657 = scalar_lea.vmem %s12, %s656
        %p658 = scmp.lt.s32.totalorder %s29, 1
        %s659 = scalar_select %p658, %s29, 1
        %s660 = scalar_lea.vmem %s13, %s659
        %p661 = scmp.lt.s32.totalorder %s29, 1
        %s662 = scalar_select %p661, %s29, 1
        %s663 = scalar_lea.vmem %s14, %s662
        %p664 = scmp.lt.s32.totalorder %s29, 1
        %s665 = scalar_select %p664, %s29, 1
        %s666 = scalar_lea.vmem %s15, %s665
        %p668 = scmp.eq.s32.totalorder %s29, 0
        // Predicated region
        $region85: #{tpu_custom_call.1} parent=79 // pred_check
          %p669 = pneg %p668
        $region86: #{tpu_custom_call.1} parent=79 // pred_check_branch
          %671 = sbr.rel (%p669) target = $region88
        $region87: #{tpu_custom_call.1} parent=79 // pred_region
          // Predicated region
          $region89: #{tpu_custom_call.1} parent=87 // pred_check
            _
          $region90: #{tpu_custom_call.1} parent=87 // pred_check_branch
            %673 = sbr.rel target = $region92
          $region91: #{tpu_custom_call.1} parent=87 // pred_region
            %674 = sst [smem:[#allocation9]] [#allocation8]
            %675 = sst [smem:[#allocation10]] [#allocation7]
          $region92: #{tpu_custom_call.1} parent=87 // pred_fallthru
            _
          %677 = shalt.err (0)
          %s679 = sshll.u32 [#allocation6], 4
          %s680 = int_to_ptr.vmem [resolvable:$true] %s679
          %682 = dma.hbm_to_vmem [thread:$0]  %s0, 256, %s680, [#allocation2]
          %s683 = smul.u32 16, 1
          %s684 = sshll.u32 %s683, 4
          %685 = dma.done [#allocation2], %s684
          %v686 = vld [vmem:[#allocation6] sm:$0xff]
          %v687 = vld [vmem:[#allocation6 + $0x8] sm:$0xff]
          %v688 = vld [vmem:[%s2] sm:$0x1]
          %v689 = vld [vmem:[#allocation3] sm:$0x1]
          %vm690 = vcmask 261120
          %v691 = vsel %vm690, %v686, 0.0
          %692 = vadd.xlane.f32.xlu0 %v691
          %v693 = vpop.xlane.xlu0 %692
          %v694 = vsel %vm690, %v687, 0.0
          %695 = vadd.xlane.f32.xlu0 %v694
          %v696 = vpop.xlane.xlu0 %695
          %v697 = vrcp.pop 32.0
          %v698 = vmul.f32 %v693, %v697
          %v699 = vmul.f32 %v696, %v697
          %v700 = vsub.f32 %v686, %v698
          %v701 = vsub.f32 %v687, %v699
          %v702 = vmul.f32 %v700, %v700
          %v703 = vmul.f32 %v701, %v701
          %v704 = vsel %vm690, %v702, 0.0
          %705 = vadd.xlane.f32.xlu0 %v704
          %v706 = vpop.xlane.xlu0 %705
          %v707 = vsel %vm690, %v703, 0.0
          %708 = vadd.xlane.f32.xlu0 %v707
          %v709 = vpop.xlane.xlu0 %708
          %v710 = vmul.f32 %v706, %v697
          %v711 = vmul.f32 %v709, %v697
          %v712 = vadd.f32 %v710, 1e-12
          %v713 = vadd.f32 %v711, 1e-12
          %v714 = vrsqrt.pop %v712
          %v715 = vrsqrt.pop %v713
          %v716 = vmul.f32 %v700, %v714
          %v717 = vmul.f32 %v701, %v715
          %v719 = vlaneseq
          %v720 = vshrl.u32 %v719, 7
          %v721 = vsub.s32 0, %v720
          %v722 = vrot.slane %v688, %v721
          %v724 = vmul.f32 %v716, %v722
          %v725 = vmul.f32 %v717, %v722
          %v727 = vlaneseq
          %v728 = vshrl.u32 %v727, 7
          %v729 = vsub.s32 0, %v728
          %v730 = vrot.slane %v689, %v729
          %v732 = vadd.f32 %v724, %v730
          %v733 = vadd.f32 %v725, %v730
          %734 = vst.msk [vmem:[#allocation6] sm:$0xff] %vm690, %v732
          %735 = vst.msk [vmem:[#allocation6 + $0x8] sm:$0xff] %vm690, %v733
        $region88: #{tpu_custom_call.1} parent=79 // pred_fallthru
          _
        %v736 = vld [vmem:[#allocation6] sm:$0xff]
        %v737 = vld [vmem:[#allocation6 + $0x8] sm:$0xff]
        %v738 = vpack.c.bf16 %v737, %v736
        %v739 = vld [vmem:[%s1] sm:$0x3]
        %v742 = vunpack.c.l.s4 1966171168
        %v743 = vunpack.c.0.s8 %v742
        %v744 = vlaneseq
        %v745 = vshrl.u32 %v744, 7
        %v746 = vsub.s32 %v743, %v745
        %v747 = vrot.slane %v739, %v746
        %v748 = vcombine.high %v747, %v747
        %v750 = vunpack.c.l.s4 1966171168
        %v751 = vunpack.c.0.s8 %v750
        %v752 = vlaneseq
        %v753 = vshrl.u32 %v752, 7
        %v754 = vsub.s32 %v751, %v753
        %v755 = vrot.slane %v747, %v754
        %v757 = vunpack.c.l.s4 1966171168
        %v758 = vunpack.c.0.s8 %v757
        %v759 = vlaneseq
        %v760 = vshrl.u32 %v759, 7
        %v761 = vsub.s32 %v758, %v760
        %v762 = vrot.slane %v748, %v761
        %v763 = vld [vmem:[%s627] sm:$0xf]
        %v764 = vld [vmem:[%s627 + $0x4] sm:$0xf]
        %v765 = vld [vmem:[%s627 + $0x8] sm:$0xf]
        %v766 = vld [vmem:[%s627 + $0xc] sm:$0xf]
        %v767 = vld [vmem:[%s630] sm:$0x1]
        %v769 = vlaneseq
        %v770 = vshrl.u32 %v769, 7
        %v771 = vsub.s32 0, %v770
        %v772 = vrot.slane %v767, %v771
        %v778 = vunpack.c.l.b16 %v763
        %v779 = vunpack.c.l.b16 %v764
        %v780 = vunpack.c.l.b16 %v765
        %v781 = vunpack.c.l.b16 %v766
        %v782 = vpack.c.b16 %v779, %v778
        %v783 = vpack.c.b16 %v781, %v780
        %vm786 = vcmask 261120
        %v788 = vsel %vm786, %v738, 0
        %790 = vmatprep.subr.bf16.mxu0 0
        %791 = vmatpush1.bf16.msra.mxu0 %v782
        %792 = vmatprep.subr.bf16.mxu0 0
        %793 = vmatpush1.bf16.msra.mxu0 %v783
        %794 = vmatprep.subr.bf16.mxu0 0
        %795 = vmatpush1.bf16.msra.mxu0 0
        %796 = vmatprep.subr.bf16.mxu0 0
        %797 = vmatpush1.bf16.msra.mxu0 0
        %798 = vmatprep.subr.bf16.mxu0 0
        %799 = vmatpush1.bf16.msra.mxu0 0
        %800 = vmatprep.subr.bf16.mxu0 0
        %801 = vmatpush1.bf16.msra.mxu0 0
        %802 = vmatprep.subr.bf16.mxu0 0
        %803 = vmatpush1.bf16.msra.mxu0 0
        %804 = vmatprep.subr.bf16.mxu0 0
        %805 = vmatpush1.bf16.msra.mxu0 0
        %806 = vmatprep.subr.bf16.mxu0 0
        %807 = vmatpush1.bf16.msra.mxu0 0
        %808 = vmatprep.subr.bf16.mxu0 0
        %809 = vmatpush1.bf16.msra.mxu0 0
        %810 = vmatprep.subr.bf16.mxu0 0
        %811 = vmatpush1.bf16.msra.mxu0 0
        %812 = vmatprep.subr.bf16.mxu0 0
        %813 = vmatpush1.bf16.msra.mxu0 0
        %814 = vmatprep.subr.bf16.mxu0 0
        %815 = vmatpush1.bf16.msra.mxu0 0
        %816 = vmatprep.subr.bf16.mxu0 0
        %817 = vmatpush1.bf16.msra.mxu0 0
        %818 = vmatprep.subr.bf16.mxu0 0
        %819 = vmatpush1.bf16.msra.mxu0 0
        %820 = vmatprep.subr.bf16.mxu0 0
        %821 = vmatpush1.bf16.msra.mxu0 0
        %822 = vmatprep.mubr.bf16.mxu0 0
        %823 = vmatmul.mubr.bf16.gmra.mrb[0].mxu0 %v788
        %v824 = vpop.f32.mrb[0].mxu0
        %v825 = vadd.f32 %v772, %v824
        %v826 = vpop.f32.mrb[0].mxu0
        %v827 = vpop.f32.mrb[0].mxu0
        %v828 = vadd.f32 %v772, %v827
        %v829 = vpop.f32.mrb[0].mxu0
        %830 = vdwg.mxu0
        %v831 = vmul.f32 %v825, 0.35355338
        %v832 = vmul.f32 %v828, 0.35355338
        %v833 = vpack.c.bf16 %v831, %v831
        %v834 = vpack.c.bf16 %v832, %v832
        %v835 = vpack.c.bf16 %v825, %v825
        %v836 = vpack.c.bf16 %v828, %v828
        %v837 = vlaneseq
        %v838 = vshrl.u32 %v837, 7
        %v839 = vsub.s32 0, %v838
        %v840 = vrot.slane %v755, %v839
        %v841 = vlaneseq
        %v842 = vshrl.u32 %v841, 7
        %v843 = vsub.s32 0, %v842
        %v844 = vrot.slane %v762, %v843
        %848 = vrot.lane.b32.xlu0 %v835, 96
        %v849 = vpop.permute.xlu0 %848
        %vm850 = vcmask 64512
        %v852 = vsel %vm850, %v833, 0
        %v855 = vsel %vm850, %v849, 0
        %857 = vmatprep.subr.bf16.mxu0 0
        %858 = vmatpush1.bf16.xpose.msra.mxu0 %v855
        %859 = vmatprep.subr.bf16.mxu0 0
        %860 = vmatpush1.bf16.xpose.msra.mxu0 0
        %861 = vmatprep.subr.bf16.mxu0 0
        %862 = vmatpush1.bf16.xpose.msra.mxu0 0
        %863 = vmatprep.subr.bf16.mxu0 0
        %864 = vmatpush1.bf16.xpose.msra.mxu0 0
        %865 = vmatprep.subr.bf16.mxu0 0
        %866 = vmatpush1.bf16.xpose.msra.mxu0 0
        %867 = vmatprep.subr.bf16.mxu0 0
        %868 = vmatpush1.bf16.xpose.msra.mxu0 0
        %869 = vmatprep.subr.bf16.mxu0 0
        %870 = vmatpush1.bf16.xpose.msra.mxu0 0
        %871 = vmatprep.subr.bf16.mxu0 0
        %872 = vmatpush1.bf16.xpose.msra.mxu0 0
        %873 = vmatprep.subr.bf16.mxu0 0
        %874 = vmatpush1.bf16.xpose.msra.mxu0 0
        %875 = vmatprep.subr.bf16.mxu0 0
        %876 = vmatpush1.bf16.xpose.msra.mxu0 0
        %877 = vmatprep.subr.bf16.mxu0 0
        %878 = vmatpush1.bf16.xpose.msra.mxu0 0
        %879 = vmatprep.subr.bf16.mxu0 0
        %880 = vmatpush1.bf16.xpose.msra.mxu0 0
        %881 = vmatprep.subr.bf16.mxu0 0
        %882 = vmatpush1.bf16.xpose.msra.mxu0 0
        %883 = vmatprep.subr.bf16.mxu0 0
        %884 = vmatpush1.bf16.xpose.msra.mxu0 0
        %885 = vmatprep.subr.bf16.mxu0 0
        %886 = vmatpush1.bf16.xpose.msra.mxu0 0
        %887 = vmatprep.subr.bf16.mxu0 0
        %888 = vmatpush1.bf16.xpose.msra.mxu0 0
        %889 = vmatprep.mubr.bf16.mxu0 0
        %890 = vmatmul.mubr.bf16.gmra.mrb[0].mxu0 %v852
        %v891 = vpop.f32.mrb[0].mxu0
        %v892 = vadd.f32 %v840, %v891
        %v893 = vpop.f32.mrb[0].mxu0
        %v894 = vpop.f32.mrb[0].mxu0
        %v895 = vpop.f32.mrb[0].mxu0
        %896 = vdwg.mxu0
        %898 = vrot.lane.b32.xlu0 %v836, 96
        %v899 = vpop.permute.xlu0 %898
        %v901 = vsel %vm850, %v834, 0
        %v904 = vsel %vm850, %v899, 0
        %906 = vmatprep.subr.bf16.mxu0 0
        %907 = vmatpush1.bf16.xpose.msra.mxu0 %v904
        %908 = vmatprep.subr.bf16.mxu0 0
        %909 = vmatpush1.bf16.xpose.msra.mxu0 0
        %910 = vmatprep.subr.bf16.mxu0 0
        %911 = vmatpush1.bf16.xpose.msra.mxu0 0
        %912 = vmatprep.subr.bf16.mxu0 0
        %913 = vmatpush1.bf16.xpose.msra.mxu0 0
        %914 = vmatprep.subr.bf16.mxu0 0
        %915 = vmatpush1.bf16.xpose.msra.mxu0 0
        %916 = vmatprep.subr.bf16.mxu0 0
        %917 = vmatpush1.bf16.xpose.msra.mxu0 0
        %918 = vmatprep.subr.bf16.mxu0 0
        %919 = vmatpush1.bf16.xpose.msra.mxu0 0
        %920 = vmatprep.subr.bf16.mxu0 0
        %921 = vmatpush1.bf16.xpose.msra.mxu0 0
        %922 = vmatprep.subr.bf16.mxu0 0
        %923 = vmatpush1.bf16.xpose.msra.mxu0 0
        %924 = vmatprep.subr.bf16.mxu0 0
        %925 = vmatpush1.bf16.xpose.msra.mxu0 0
        %926 = vmatprep.subr.bf16.mxu0 0
        %927 = vmatpush1.bf16.xpose.msra.mxu0 0
        %928 = vmatprep.subr.bf16.mxu0 0
        %929 = vmatpush1.bf16.xpose.msra.mxu0 0
        %930 = vmatprep.subr.bf16.mxu0 0
        %931 = vmatpush1.bf16.xpose.msra.mxu0 0
        %932 = vmatprep.subr.bf16.mxu0 0
        %933 = vmatpush1.bf16.xpose.msra.mxu0 0
        %934 = vmatprep.subr.bf16.mxu0 0
        %935 = vmatpush1.bf16.xpose.msra.mxu0 0
        %936 = vmatprep.subr.bf16.mxu0 0
        %937 = vmatpush1.bf16.xpose.msra.mxu0 0
        %938 = vmatprep.mubr.bf16.mxu0 0
        %939 = vmatmul.mubr.bf16.gmra.mrb[0].mxu0 %v901
        %v940 = vpop.f32.mrb[0].mxu0
        %v941 = vadd.f32 %v844, %v940
        %v942 = vpop.f32.mrb[0].mxu0
        %v943 = vpop.f32.mrb[0].mxu0
        %v944 = vpop.f32.mrb[0].mxu0
        %945 = vdwg.mxu0
        %v946 = vsel %vm850, %v892, -inf
        %947 = vmax.xlane.f32.xlu0 %v946
        %v948 = vpop.xlane.xlu0 %947
        %v949 = vsel %vm850, %v941, -inf
        %950 = vmax.xlane.f32.xlu0 %v949
        %v951 = vpop.xlane.xlu0 %950
        %v952 = vsub.f32 %v892, %v948
        %v953 = vsub.f32 %v941, %v951
        %v954 = vmul.f32 %v952, 1.442695
        %v955 = vpow.pop %v954
        %v956 = vmul.f32 %v953, 1.442695
        %v957 = vpow.pop %v956
        %v958 = vsel %vm850, %v955, 0.0
        %959 = vadd.xlane.f32.xlu0 %v958
        %v960 = vpop.xlane.xlu0 %959
        %v961 = vsel %vm850, %v957, 0.0
        %962 = vadd.xlane.f32.xlu0 %v961
        %v963 = vpop.xlane.xlu0 %962
        %v964 = vrcp.pop %v960
        %v965 = vrcp.pop %v963
        %v966 = vmul.f32 %v955, %v964
        %v967 = vmul.f32 %v957, %v965
        %v968 = vpack.c.bf16 %v966, %v966
        %v969 = vpack.c.bf16 %v967, %v967
        %970 = vrot.lane.b32.xlu0 %v835, 64
        %v971 = vpop.permute.xlu0 %970
        %v973 = vsel %vm850, %v968, 0
        %vm975 = vcmask 1043456
        %v977 = vsel %vm975, %v971, 0
        %979 = vmatprep.subr.bf16.mxu0 0
        %980 = vmatpush1.bf16.msra.mxu0 %v977
        %981 = vmatprep.subr.bf16.mxu0 0
        %982 = vmatpush1.bf16.msra.mxu0 0
        %983 = vmatprep.subr.bf16.mxu0 0
        %984 = vmatpush1.bf16.msra.mxu0 0
        %985 = vmatprep.subr.bf16.mxu0 0
        %986 = vmatpush1.bf16.msra.mxu0 0
        %987 = vmatprep.subr.bf16.mxu0 0
        %988 = vmatpush1.bf16.msra.mxu0 0
        %989 = vmatprep.subr.bf16.mxu0 0
        %990 = vmatpush1.bf16.msra.mxu0 0
        %991 = vmatprep.subr.bf16.mxu0 0
        %992 = vmatpush1.bf16.msra.mxu0 0
        %993 = vmatprep.subr.bf16.mxu0 0
        %994 = vmatpush1.bf16.msra.mxu0 0
        %995 = vmatprep.subr.bf16.mxu0 0
        %996 = vmatpush1.bf16.msra.mxu0 0
        %997 = vmatprep.subr.bf16.mxu0 0
        %998 = vmatpush1.bf16.msra.mxu0 0
        %999 = vmatprep.subr.bf16.mxu0 0
        %1000 = vmatpush1.bf16.msra.mxu0 0
        %1001 = vmatprep.subr.bf16.mxu0 0
        %1002 = vmatpush1.bf16.msra.mxu0 0
        %1003 = vmatprep.subr.bf16.mxu0 0
        %1004 = vmatpush1.bf16.msra.mxu0 0
        %1005 = vmatprep.subr.bf16.mxu0 0
        %1006 = vmatpush1.bf16.msra.mxu0 0
        %1007 = vmatprep.subr.bf16.mxu0 0
        %1008 = vmatpush1.bf16.msra.mxu0 0
        %1009 = vmatprep.subr.bf16.mxu0 0
        %1010 = vmatpush1.bf16.msra.mxu0 0
        %1011 = vmatprep.mubr.bf16.mxu0 0
        %1012 = vmatmul.mubr.bf16.gmra.mrb[0].mxu0 %v973
        %v1013 = vpop.f32.mrb[0].mxu0
        %v1014 = vadd.f32 0.0, %v1013
        %v1015 = vpop.f32.mrb[0].mxu0
        %v1016 = vpop.f32.mrb[0].mxu0
        %v1017 = vpop.f32.mrb[0].mxu0
        %1018 = vdwg.mxu0
        %1019 = vrot.lane.b32.xlu0 %v836, 64
        %v1020 = vpop.permute.xlu0 %1019
        %v1022 = vsel %vm850, %v969, 0
        %v1025 = vsel %vm975, %v1020, 0
        %1027 = vmatprep.subr.bf16.mxu0 0
        %1028 = vmatpush1.bf16.msra.mxu0 %v1025
        %1029 = vmatprep.subr.bf16.mxu0 0
        %1030 = vmatpush1.bf16.msra.mxu0 0
        %1031 = vmatprep.subr.bf16.mxu0 0
        %1032 = vmatpush1.bf16.msra.mxu0 0
        %1033 = vmatprep.subr.bf16.mxu0 0
        %1034 = vmatpush1.bf16.msra.mxu0 0
        %1035 = vmatprep.subr.bf16.mxu0 0
        %1036 = vmatpush1.bf16.msra.mxu0 0
        %1037 = vmatprep.subr.bf16.mxu0 0
        %1038 = vmatpush1.bf16.msra.mxu0 0
        %1039 = vmatprep.subr.bf16.mxu0 0
        %1040 = vmatpush1.bf16.msra.mxu0 0
        %1041 = vmatprep.subr.bf16.mxu0 0
        %1042 = vmatpush1.bf16.msra.mxu0 0
        %1043 = vmatprep.subr.bf16.mxu0 0
        %1044 = vmatpush1.bf16.msra.mxu0 0
        %1045 = vmatprep.subr.bf16.mxu0 0
        %1046 = vmatpush1.bf16.msra.mxu0 0
        %1047 = vmatprep.subr.bf16.mxu0 0
        %1048 = vmatpush1.bf16.msra.mxu0 0
        %1049 = vmatprep.subr.bf16.mxu0 0
        %1050 = vmatpush1.bf16.msra.mxu0 0
        %1051 = vmatprep.subr.bf16.mxu0 0
        %1052 = vmatpush1.bf16.msra.mxu0 0
        %1053 = vmatprep.subr.bf16.mxu0 0
        %1054 = vmatpush1.bf16.msra.mxu0 0
        %1055 = vmatprep.subr.bf16.mxu0 0
        %1056 = vmatpush1.bf16.msra.mxu0 0
        %1057 = vmatprep.subr.bf16.mxu0 0
        %1058 = vmatpush1.bf16.msra.mxu0 0
        %1059 = vmatprep.mubr.bf16.mxu0 0
        %1060 = vmatmul.mubr.bf16.gmra.mrb[0].mxu0 %v1022
        %v1061 = vpop.f32.mrb[0].mxu0
        %v1062 = vadd.f32 0.0, %v1061
        %v1063 = vpop.f32.mrb[0].mxu0
        %v1064 = vpop.f32.mrb[0].mxu0
        %v1065 = vpop.f32.mrb[0].mxu0
        %1066 = vdwg.mxu0
        %1068 = vrot.lane.b32.xlu0 %v833, 120
        %v1069 = vpop.permute.xlu0 %1068
        %1070 = vrot.lane.b32.xlu0 %v835, 88
        %v1071 = vpop.permute.xlu0 %1070
        %v1073 = vsel %vm850, %v1069, 0
        %v1076 = vsel %vm850, %v1071, 0
        %1078 = vmatprep.subr.bf16.mxu0 0
        %1079 = vmatpush1.bf16.xpose.msra.mxu0 %v1076
        %1080 = vmatprep.subr.bf16.mxu0 0
        %1081 = vmatpush1.bf16.xpose.msra.mxu0 0
        %1082 = vmatprep.subr.bf16.mxu0 0
        %1083 = vmatpush1.bf16.xpose.msra.mxu0 0
        %1084 = vmatprep.subr.bf16.mxu0 0
        %1085 = vmatpush1.bf16.xpose.msra.mxu0 0
        %1086 = vmatprep.subr.bf16.mxu0 0
        %1087 = vmatpush1.bf16.xpose.msra.mxu0 0
        %1088 = vmatprep.subr.bf16.mxu0 0
        %1089 = vmatpush1.bf16.xpose.msra.mxu0 0
        %1090 = vmatprep.subr.bf16.mxu0 0
        %1091 = vmatpush1.bf16.xpose.msra.mxu0 0
        %1092 = vmatprep.subr.bf16.mxu0 0
        %1093 = vmatpush1.bf16.xpose.msra.mxu0 0
        %1094 = vmatprep.subr.bf16.mxu0 0
        %1095 = vmatpush1.bf16.xpose.msra.mxu0 0
        %1096 = vmatprep.subr.bf16.mxu0 0
        %1097 = vmatpush1.bf16.xpose.msra.mxu0 0
        %1098 = vmatprep.subr.bf16.mxu0 0
        %1099 = vmatpush1.bf16.xpose.msra.mxu0 0
        %1100 = vmatprep.subr.bf16.mxu0 0
        %1101 = vmatpush1.bf16.xpose.msra.mxu0 0
        %1102 = vmatprep.subr.bf16.mxu0 0
        %1103 = vmatpush1.bf16.xpose.msra.mxu0 0
        %1104 = vmatprep.subr.bf16.mxu0 0
        %1105 = vmatpush1.bf16.xpose.msra.mxu0 0
        %1106 = vmatprep.subr.bf16.mxu0 0
        %1107 = vmatpush1.bf16.xpose.msra.mxu0 0
        %1108 = vmatprep.subr.bf16.mxu0 0
        %1109 = vmatpush1.bf16.xpose.msra.mxu0 0
        %1110 = vmatprep.mubr.bf16.mxu0 0
        %1111 = vmatmul.mubr.bf16.gmra.mrb[0].mxu0 %v1073
        %v1112 = vpop.f32.mrb[0].mxu0
        %v1113 = vadd.f32 %v840, %v1112
        %v1114 = vpop.f32.mrb[0].mxu0
        %v1115 = vpop.f32.mrb[0].mxu0
        %v1116 = vpop.f32.mrb[0].mxu0
        %1117 = vdwg.mxu0
        %1119 = vrot.lane.b32.xlu0 %v834, 120
        %v1120 = vpop.permute.xlu0 %1119
        %1121 = vrot.lane.b32.xlu0 %v836, 88
        %v1122 = vpop.permute.xlu0 %1121
        %v1124 = vsel %vm850, %v1120, 0
        %v1127 = vsel %vm850, %v1122, 0
        %1129 = vmatprep.subr.bf16.mxu0 0
        %1130 = vmatpush1.bf16.xpose.msra.mxu0 %v1127
        %1131 = vmatprep.subr.bf16.mxu0 0
        %1132 = vmatpush1.bf16.xpose.msra.mxu0 0
        %1133 = vmatprep.subr.bf16.mxu0 0
        %1134 = vmatpush1.bf16.xpose.msra.mxu0 0
        %1135 = vmatprep.subr.bf16.mxu0 0
        %1136 = vmatpush1.bf16.xpose.msra.mxu0 0
        %1137 = vmatprep.subr.bf16.mxu0 0
        %1138 = vmatpush1.bf16.xpose.msra.mxu0 0
        %1139 = vmatprep.subr.bf16.mxu0 0
        %1140 = vmatpush1.bf16.xpose.msra.mxu0 0
        %1141 = vmatprep.subr.bf16.mxu0 0
        %1142 = vmatpush1.bf16.xpose.msra.mxu0 0
        %1143 = vmatprep.subr.bf16.mxu0 0
        %1144 = vmatpush1.bf16.xpose.msra.mxu0 0
        %1145 = vmatprep.subr.bf16.mxu0 0
        %1146 = vmatpush1.bf16.xpose.msra.mxu0 0
        %1147 = vmatprep.subr.bf16.mxu0 0
        %1148 = vmatpush1.bf16.xpose.msra.mxu0 0
        %1149 = vmatprep.subr.bf16.mxu0 0
        %1150 = vmatpush1.bf16.xpose.msra.mxu0 0
        %1151 = vmatprep.subr.bf16.mxu0 0
        %1152 = vmatpush1.bf16.xpose.msra.mxu0 0
        %1153 = vmatprep.subr.bf16.mxu0 0
        %1154 = vmatpush1.bf16.xpose.msra.mxu0 0
        %1155 = vmatprep.subr.bf16.mxu0 0
        %1156 = vmatpush1.bf16.xpose.msra.mxu0 0
        %1157 = vmatprep.subr.bf16.mxu0 0
        %1158 = vmatpush1.bf16.xpose.msra.mxu0 0
        %1159 = vmatprep.subr.bf16.mxu0 0
        %1160 = vmatpush1.bf16.xpose.msra.mxu0 0
        %1161 = vmatprep.mubr.bf16.mxu0 0
        %1162 = vmatmul.mubr.bf16.gmra.mrb[0].mxu0 %v1124
        %v1163 = vpop.f32.mrb[0].mxu0
        %v1164 = vadd.f32 %v844, %v1163
        %v1165 = vpop.f32.mrb[0].mxu0
        %v1166 = vpop.f32.mrb[0].mxu0
        %v1167 = vpop.f32.mrb[0].mxu0
        %1168 = vdwg.mxu0
        %v1169 = vsel %vm850, %v1113, -inf
        %1170 = vmax.xlane.f32.xlu0 %v1169
        %v1171 = vpop.xlane.xlu0 %1170
        %v1172 = vsel %vm850, %v1164, -inf
        %1173 = vmax.xlane.f32.xlu0 %v1172
        %v1174 = vpop.xlane.xlu0 %1173
        %v1175 = vsub.f32 %v1113, %v1171
        %v1176 = vsub.f32 %v1164, %v1174
        %v1177 = vmul.f32 %v1175, 1.442695
        %v1178 = vpow.pop %v1177
        %v1179 = vmul.f32 %v1176, 1.442695
        %v1180 = vpow.pop %v1179
        %v1181 = vsel %vm850, %v1178, 0.0
        %1182 = vadd.xlane.f32.xlu0 %v1181
        %v1183 = vpop.xlane.xlu0 %1182
        %v1184 = vsel %vm850, %v1180, 0.0
        %1185 = vadd.xlane.f32.xlu0 %v1184
        %v1186 = vpop.xlane.xlu0 %1185
        %v1187 = vrcp.pop %v1183
        %v1188 = vrcp.pop %v1186
        %v1189 = vmul.f32 %v1178, %v1187
        %v1190 = vmul.f32 %v1180, %v1188
        %v1191 = vpack.c.bf16 %v1189, %v1189
        %v1192 = vpack.c.bf16 %v1190, %v1190
        %1193 = vrot.lane.b32.xlu0 %v835, 56
        %v1194 = vpop.permute.xlu0 %1193
        %v1196 = vsel %vm850, %v1191, 0
        %v1199 = vsel %vm975, %v1194, 0
        %1201 = vmatprep.subr.bf16.mxu0 0
        %1202 = vmatpush1.bf16.msra.mxu0 %v1199
        %1203 = vmatprep.subr.bf16.mxu0 0
        %1204 = vmatpush1.bf16.msra.mxu0 0
        %1205 = vmatprep.subr.bf16.mxu0 0
        %1206 = vmatpush1.bf16.msra.mxu0 0
        %1207 = vmatprep.subr.bf16.mxu0 0
        %1208 = vmatpush1.bf16.msra.mxu0 0
        %1209 = vmatprep.subr.bf16.mxu0 0
        %1210 = vmatpush1.bf16.msra.mxu0 0
        %1211 = vmatprep.subr.bf16.mxu0 0
        %1212 = vmatpush1.bf16.msra.mxu0 0
        %1213 = vmatprep.subr.bf16.mxu0 0
        %1214 = vmatpush1.bf16.msra.mxu0 0
        %1215 = vmatprep.subr.bf16.mxu0 0
        %1216 = vmatpush1.bf16.msra.mxu0 0
        %1217 = vmatprep.subr.bf16.mxu0 0
        %1218 = vmatpush1.bf16.msra.mxu0 0
        %1219 = vmatprep.subr.bf16.mxu0 0
        %1220 = vmatpush1.bf16.msra.mxu0 0
        %1221 = vmatprep.subr.bf16.mxu0 0
        %1222 = vmatpush1.bf16.msra.mxu0 0
        %1223 = vmatprep.subr.bf16.mxu0 0
        %1224 = vmatpush1.bf16.msra.mxu0 0
        %1225 = vmatprep.subr.bf16.mxu0 0
        %1226 = vmatpush1.bf16.msra.mxu0 0
        %1227 = vmatprep.subr.bf16.mxu0 0
        %1228 = vmatpush1.bf16.msra.mxu0 0
        %1229 = vmatprep.subr.bf16.mxu0 0
        %1230 = vmatpush1.bf16.msra.mxu0 0
        %1231 = vmatprep.subr.bf16.mxu0 0
        %1232 = vmatpush1.bf16.msra.mxu0 0
        %1233 = vmatprep.mubr.bf16.mxu0 0
        %1234 = vmatmul.mubr.bf16.gmra.mrb[0].mxu0 %v1196
        %v1235 = vpop.f32.mrb[0].mxu0
        %v1236 = vadd.f32 0.0, %v1235
        %v1237 = vpop.f32.mrb[0].mxu0
        %v1238 = vpop.f32.mrb[0].mxu0
        %v1239 = vpop.f32.mrb[0].mxu0
        %1240 = vdwg.mxu0
        %1241 = vrot.lane.b32.xlu0 %v836, 56
        %v1242 = vpop.permute.xlu0 %1241
        %v1244 = vsel %vm850, %v1192, 0
        %v1247 = vsel %vm975, %v1242, 0
        %1249 = vmatprep.subr.bf16.mxu0 0
        %1250 = vmatpush1.bf16.msra.mxu0 %v1247
        %1251 = vmatprep.subr.bf16.mxu0 0
        %1252 = vmatpush1.bf16.msra.mxu0 0
        %1253 = vmatprep.subr.bf16.mxu0 0
        %1254 = vmatpush1.bf16.msra.mxu0 0
        %1255 = vmatprep.subr.bf16.mxu0 0
        %1256 = vmatpush1.bf16.msra.mxu0 0
        %1257 = vmatprep.subr.bf16.mxu0 0
        %1258 = vmatpush1.bf16.msra.mxu0 0
        %1259 = vmatprep.subr.bf16.mxu0 0
        %1260 = vmatpush1.bf16.msra.mxu0 0
        %1261 = vmatprep.subr.bf16.mxu0 0
        %1262 = vmatpush1.bf16.msra.mxu0 0
        %1263 = vmatprep.subr.bf16.mxu0 0
        %1264 = vmatpush1.bf16.msra.mxu0 0
        %1265 = vmatprep.subr.bf16.mxu0 0
        %1266 = vmatpush1.bf16.msra.mxu0 0
        %1267 = vmatprep.subr.bf16.mxu0 0
        %1268 = vmatpush1.bf16.msra.mxu0 0
        %1269 = vmatprep.subr.bf16.mxu0 0
        %1270 = vmatpush1.bf16.msra.mxu0 0
        %1271 = vmatprep.subr.bf16.mxu0 0
        %1272 = vmatpush1.bf16.msra.mxu0 0
        %1273 = vmatprep.subr.bf16.mxu0 0
        %1274 = vmatpush1.bf16.msra.mxu0 0
        %1275 = vmatprep.subr.bf16.mxu0 0
        %1276 = vmatpush1.bf16.msra.mxu0 0
        %1277 = vmatprep.subr.bf16.mxu0 0
        %1278 = vmatpush1.bf16.msra.mxu0 0
        %1279 = vmatprep.subr.bf16.mxu0 0
        %1280 = vmatpush1.bf16.msra.mxu0 0
        %1281 = vmatprep.mubr.bf16.mxu0 0
        %1282 = vmatmul.mubr.bf16.gmra.mrb[0].mxu0 %v1244
        %v1283 = vpop.f32.mrb[0].mxu0
        %v1284 = vadd.f32 0.0, %v1283
        %v1285 = vpop.f32.mrb[0].mxu0
        %v1286 = vpop.f32.mrb[0].mxu0
        %v1287 = vpop.f32.mrb[0].mxu0
        %1288 = vdwg.mxu0
        %1289 = vrot.lane.b32.xlu0 %v833, 112
        %v1290 = vpop.permute.xlu0 %1289
        %1291 = vrot.lane.b32.xlu0 %v835, 80
        %v1292 = vpop.permute.xlu0 %1291
        %v1294 = vsel %vm850, %v1290, 0
        %v1297 = vsel %vm850, %v1292, 0
        %1299 = vmatprep.subr.bf16.mxu0 0
        %1300 = vmatpush1.bf16.xpose.msra.mxu0 %v1297
        %1301 = vmatprep.subr.bf16.mxu0 0
        %1302 = vmatpush1.bf16.xpose.msra.mxu0 0
        %1303 = vmatprep.subr.bf16.mxu0 0
        %1304 = vmatpush1.bf16.xpose.msra.mxu0 0
        %1305 = vmatprep.subr.bf16.mxu0 0
        %1306 = vmatpush1.bf16.xpose.msra.mxu0 0
        %1307 = vmatprep.subr.bf16.mxu0 0
        %1308 = vmatpush1.bf16.xpose.msra.mxu0 0
        %1309 = vmatprep.subr.bf16.mxu0 0
        %1310 = vmatpush1.bf16.xpose.msra.mxu0 0
        %1311 = vmatprep.subr.bf16.mxu0 0
        %1312 = vmatpush1.bf16.xpose.msra.mxu0 0
        %1313 = vmatprep.subr.bf16.mxu0 0
        %1314 = vmatpush1.bf16.xpose.msra.mxu0 0
        %1315 = vmatprep.subr.bf16.mxu0 0
        %1316 = vmatpush1.bf16.xpose.msra.mxu0 0
        %1317 = vmatprep.subr.bf16.mxu0 0
        %1318 = vmatpush1.bf16.xpose.msra.mxu0 0
        %1319 = vmatprep.subr.bf16.mxu0 0
        %1320 = vmatpush1.bf16.xpose.msra.mxu0 0
        %1321 = vmatprep.subr.bf16.mxu0 0
        %1322 = vmatpush1.bf16.xpose.msra.mxu0 0
        %1323 = vmatprep.subr.bf16.mxu0 0
        %1324 = vmatpush1.bf16.xpose.msra.mxu0 0
        %1325 = vmatprep.subr.bf16.mxu0 0
        %1326 = vmatpush1.bf16.xpose.msra.mxu0 0
        %1327 = vmatprep.subr.bf16.mxu0 0
        %1328 = vmatpush1.bf16.xpose.msra.mxu0 0
        %1329 = vmatprep.subr.bf16.mxu0 0
        %1330 = vmatpush1.bf16.xpose.msra.mxu0 0
        %1331 = vmatprep.mubr.bf16.mxu0 0
        %1332 = vmatmul.mubr.bf16.gmra.mrb[0].mxu0 %v1294
        %v1333 = vpop.f32.mrb[0].mxu0
        %v1334 = vadd.f32 %v840, %v1333
        %v1335 = vpop.f32.mrb[0].mxu0
        %v1336 = vpop.f32.mrb[0].mxu0
        %v1337 = vpop.f32.mrb[0].mxu0
        %1338 = vdwg.mxu0
        %1339 = vrot.lane.b32.xlu0 %v834, 112
        %v1340 = vpop.permute.xlu0 %1339
        %1341 = vrot.lane.b32.xlu0 %v836, 80
        %v1342 = vpop.permute.xlu0 %1341
        %v1344 = vsel %vm850, %v1340, 0
        %v1347 = vsel %vm850, %v1342, 0
        %1349 = vmatprep.subr.bf16.mxu0 0
        %1350 = vmatpush1.bf16.xpose.msra.mxu0 %v1347
        %1351 = vmatprep.subr.bf16.mxu0 0
        %1352 = vmatpush1.bf16.xpose.msra.mxu0 0
        %1353 = vmatprep.subr.bf16.mxu0 0
        %1354 = vmatpush1.bf16.xpose.msra.mxu0 0
        %1355 = vmatprep.subr.bf16.mxu0 0
        %1356 = vmatpush1.bf16.xpose.msra.mxu0 0
        %1357 = vmatprep.subr.bf16.mxu0 0
        %1358 = vmatpush1.bf16.xpose.msra.mxu0 0
        %1359 = vmatprep.subr.bf16.mxu0 0
        %1360 = vmatpush1.bf16.xpose.msra.mxu0 0
        %1361 = vmatprep.subr.bf16.mxu0 0
        %1362 = vmatpush1.bf16.xpose.msra.mxu0 0
        %1363 = vmatprep.subr.bf16.mxu0 0
        %1364 = vmatpush1.bf16.xpose.msra.mxu0 0
        %1365 = vmatprep.subr.bf16.mxu0 0
        %1366 = vmatpush1.bf16.xpose.msra.mxu0 0
        %1367 = vmatprep.subr.bf16.mxu0 0
        %1368 = vmatpush1.bf16.xpose.msra.mxu0 0
        %1369 = vmatprep.subr.bf16.mxu0 0
        %1370 = vmatpush1.bf16.xpose.msra.mxu0 0
        %1371 = vmatprep.subr.bf16.mxu0 0
        %1372 = vmatpush1.bf16.xpose.msra.mxu0 0
        %1373 = vmatprep.subr.bf16.mxu0 0
        %1374 = vmatpush1.bf16.xpose.msra.mxu0 0
        %1375 = vmatprep.subr.bf16.mxu0 0
        %1376 = vmatpush1.bf16.xpose.msra.mxu0 0
        %1377 = vmatprep.subr.bf16.mxu0 0
        %1378 = vmatpush1.bf16.xpose.msra.mxu0 0
        %1379 = vmatprep.subr.bf16.mxu0 0
        %1380 = vmatpush1.bf16.xpose.msra.mxu0 0
        %1381 = vmatprep.mubr.bf16.mxu0 0
        %1382 = vmatmul.mubr.bf16.gmra.mrb[0].mxu0 %v1344
        %v1383 = vpop.f32.mrb[0].mxu0
        %v1384 = vadd.f32 %v844, %v1383
        %v1385 = vpop.f32.mrb[0].mxu0
        %v1386 = vpop.f32.mrb[0].mxu0
        %v1387 = vpop.f32.mrb[0].mxu0
        %1388 = vdwg.mxu0
        %v1389 = vsel %vm850, %v1334, -inf
        %1390 = vmax.xlane.f32.xlu0 %v1389
        %v1391 = vpop.xlane.xlu0 %1390
        %v1392 = vsel %vm850, %v1384, -inf
        %1393 = vmax.xlane.f32.xlu0 %v1392
        %v1394 = vpop.xlane.xlu0 %1393
        %v1395 = vsub.f32 %v1334, %v1391
        %v1396 = vsub.f32 %v1384, %v1394
        %v1397 = vmul.f32 %v1395, 1.442695
        %v1398 = vpow.pop %v1397
        %v1399 = vmul.f32 %v1396, 1.442695
        %v1400 = vpow.pop %v1399
        %v1401 = vsel %vm850, %v1398, 0.0
        %1402 = vadd.xlane.f32.xlu0 %v1401
        %v1403 = vpop.xlane.xlu0 %1402
        %v1404 = vsel %vm850, %v1400, 0.0
        %1405 = vadd.xlane.f32.xlu0 %v1404
        %v1406 = vpop.xlane.xlu0 %1405
        %v1407 = vrcp.pop %v1403
        %v1408 = vrcp.pop %v1406
        %v1409 = vmul.f32 %v1398, %v1407
        %v1410 = vmul.f32 %v1400, %v1408
        %v1411 = vpack.c.bf16 %v1409, %v1409
        %v1412 = vpack.c.bf16 %v1410, %v1410
        %1413 = vrot.lane.b32.xlu0 %v835, 48
        %v1414 = vpop.permute.xlu0 %1413
        %v1416 = vsel %vm850, %v1411, 0
        %v1419 = vsel %vm975, %v1414, 0
        %1421 = vmatprep.subr.bf16.mxu0 0
        %1422 = vmatpush1.bf16.msra.mxu0 %v1419
        %1423 = vmatprep.subr.bf16.mxu0 0
        %1424 = vmatpush1.bf16.msra.mxu0 0
        %1425 = vmatprep.subr.bf16.mxu0 0
        %1426 = vmatpush1.bf16.msra.mxu0 0
        %1427 = vmatprep.subr.bf16.mxu0 0
        %1428 = vmatpush1.bf16.msra.mxu0 0
        %1429 = vmatprep.subr.bf16.mxu0 0
        %1430 = vmatpush1.bf16.msra.mxu0 0
        %1431 = vmatprep.subr.bf16.mxu0 0
        %1432 = vmatpush1.bf16.msra.mxu0 0
        %1433 = vmatprep.subr.bf16.mxu0 0
        %1434 = vmatpush1.bf16.msra.mxu0 0
        %1435 = vmatprep.subr.bf16.mxu0 0
        %1436 = vmatpush1.bf16.msra.mxu0 0
        %1437 = vmatprep.subr.bf16.mxu0 0
        %1438 = vmatpush1.bf16.msra.mxu0 0
        %1439 = vmatprep.subr.bf16.mxu0 0
        %1440 = vmatpush1.bf16.msra.mxu0 0
        %1441 = vmatprep.subr.bf16.mxu0 0
        %1442 = vmatpush1.bf16.msra.mxu0 0
        %1443 = vmatprep.subr.bf16.mxu0 0
        %1444 = vmatpush1.bf16.msra.mxu0 0
        %1445 = vmatprep.subr.bf16.mxu0 0
        %1446 = vmatpush1.bf16.msra.mxu0 0
        %1447 = vmatprep.subr.bf16.mxu0 0
        %1448 = vmatpush1.bf16.msra.mxu0 0
        %1449 = vmatprep.subr.bf16.mxu0 0
        %1450 = vmatpush1.bf16.msra.mxu0 0
        %1451 = vmatprep.subr.bf16.mxu0 0
        %1452 = vmatpush1.bf16.msra.mxu0 0
        %1453 = vmatprep.mubr.bf16.mxu0 0
        %1454 = vmatmul.mubr.bf16.gmra.mrb[0].mxu0 %v1416
        %v1455 = vpop.f32.mrb[0].mxu0
        %v1456 = vadd.f32 0.0, %v1455
        %v1457 = vpop.f32.mrb[0].mxu0
        %v1458 = vpop.f32.mrb[0].mxu0
        %v1459 = vpop.f32.mrb[0].mxu0
        %1460 = vdwg.mxu0
        %1461 = vrot.lane.b32.xlu0 %v836, 48
        %v1462 = vpop.permute.xlu0 %1461
        %v1464 = vsel %vm850, %v1412, 0
        %v1467 = vsel %vm975, %v1462, 0
        %1469 = vmatprep.subr.bf16.mxu0 0
        %1470 = vmatpush1.bf16.msra.mxu0 %v1467
        %1471 = vmatprep.subr.bf16.mxu0 0
        %1472 = vmatpush1.bf16.msra.mxu0 0
        %1473 = vmatprep.subr.bf16.mxu0 0
        %1474 = vmatpush1.bf16.msra.mxu0 0
        %1475 = vmatprep.subr.bf16.mxu0 0
        %1476 = vmatpush1.bf16.msra.mxu0 0
        %1477 = vmatprep.subr.bf16.mxu0 0
        %1478 = vmatpush1.bf16.msra.mxu0 0
        %1479 = vmatprep.subr.bf16.mxu0 0
        %1480 = vmatpush1.bf16.msra.mxu0 0
        %1481 = vmatprep.subr.bf16.mxu0 0
        %1482 = vmatpush1.bf16.msra.mxu0 0
        %1483 = vmatprep.subr.bf16.mxu0 0
        %1484 = vmatpush1.bf16.msra.mxu0 0
        %1485 = vmatprep.subr.bf16.mxu0 0
        %1486 = vmatpush1.bf16.msra.mxu0 0
        %1487 = vmatprep.subr.bf16.mxu0 0
        %1488 = vmatpush1.bf16.msra.mxu0 0
        %1489 = vmatprep.subr.bf16.mxu0 0
        %1490 = vmatpush1.bf16.msra.mxu0 0
        %1491 = vmatprep.subr.bf16.mxu0 0
        %1492 = vmatpush1.bf16.msra.mxu0 0
        %1493 = vmatprep.subr.bf16.mxu0 0
        %1494 = vmatpush1.bf16.msra.mxu0 0
        %1495 = vmatprep.subr.bf16.mxu0 0
        %1496 = vmatpush1.bf16.msra.mxu0 0
        %1497 = vmatprep.subr.bf16.mxu0 0
        %1498 = vmatpush1.bf16.msra.mxu0 0
        %1499 = vmatprep.subr.bf16.mxu0 0
        %1500 = vmatpush1.bf16.msra.mxu0 0
        %1501 = vmatprep.mubr.bf16.mxu0 0
        %1502 = vmatmul.mubr.bf16.gmra.mrb[0].mxu0 %v1464
        %v1503 = vpop.f32.mrb[0].mxu0
        %v1504 = vadd.f32 0.0, %v1503
        %v1505 = vpop.f32.mrb[0].mxu0
        %v1506 = vpop.f32.mrb[0].mxu0
        %v1507 = vpop.f32.mrb[0].mxu0
        %1508 = vdwg.mxu0
        %1509 = vrot.lane.b32.xlu0 %v833, 104
        %v1510 = vpop.permute.xlu0 %1509
        %1511 = vrot.lane.b32.xlu0 %v835, 72
        %v1512 = vpop.permute.xlu0 %1511
        %v1514 = vsel %vm850, %v1510, 0
        %v1517 = vsel %vm850, %v1512, 0
        %1519 = vmatprep.subr.bf16.mxu0 0
        %1520 = vmatpush1.bf16.xpose.msra.mxu0 %v1517
        %1521 = vmatprep.subr.bf16.mxu0 0
        %1522 = vmatpush1.bf16.xpose.msra.mxu0 0
        %1523 = vmatprep.subr.bf16.mxu0 0
        %1524 = vmatpush1.bf16.xpose.msra.mxu0 0
        %1525 = vmatprep.subr.bf16.mxu0 0
        %1526 = vmatpush1.bf16.xpose.msra.mxu0 0
        %1527 = vmatprep.subr.bf16.mxu0 0
        %1528 = vmatpush1.bf16.xpose.msra.mxu0 0
        %1529 = vmatprep.subr.bf16.mxu0 0
        %1530 = vmatpush1.bf16.xpose.msra.mxu0 0
        %1531 = vmatprep.subr.bf16.mxu0 0
        %1532 = vmatpush1.bf16.xpose.msra.mxu0 0
        %1533 = vmatprep.subr.bf16.mxu0 0
        %1534 = vmatpush1.bf16.xpose.msra.mxu0 0
        %1535 = vmatprep.subr.bf16.mxu0 0
        %1536 = vmatpush1.bf16.xpose.msra.mxu0 0
        %1537 = vmatprep.subr.bf16.mxu0 0
        %1538 = vmatpush1.bf16.xpose.msra.mxu0 0
        %1539 = vmatprep.subr.bf16.mxu0 0
        %1540 = vmatpush1.bf16.xpose.msra.mxu0 0
        %1541 = vmatprep.subr.bf16.mxu0 0
        %1542 = vmatpush1.bf16.xpose.msra.mxu0 0
        %1543 = vmatprep.subr.bf16.mxu0 0
        %1544 = vmatpush1.bf16.xpose.msra.mxu0 0
        %1545 = vmatprep.subr.bf16.mxu0 0
        %1546 = vmatpush1.bf16.xpose.msra.mxu0 0
        %1547 = vmatprep.subr.bf16.mxu0 0
        %1548 = vmatpush1.bf16.xpose.msra.mxu0 0
        %1549 = vmatprep.subr.bf16.mxu0 0
        %1550 = vmatpush1.bf16.xpose.msra.mxu0 0
        %1551 = vmatprep.mubr.bf16.mxu0 0
        %1552 = vmatmul.mubr.bf16.gmra.mrb[0].mxu0 %v1514
        %v1553 = vpop.f32.mrb[0].mxu0
        %v1554 = vadd.f32 %v840, %v1553
        %v1555 = vpop.f32.mrb[0].mxu0
        %v1556 = vpop.f32.mrb[0].mxu0
        %v1557 = vpop.f32.mrb[0].mxu0
        %1558 = vdwg.mxu0
        %1559 = vrot.lane.b32.xlu0 %v834, 104
        %v1560 = vpop.permute.xlu0 %1559
        %1561 = vrot.lane.b32.xlu0 %v836, 72
        %v1562 = vpop.permute.xlu0 %1561
        %v1564 = vsel %vm850, %v1560, 0
        %v1567 = vsel %vm850, %v1562, 0
        %1569 = vmatprep.subr.bf16.mxu0 0
        %1570 = vmatpush1.bf16.xpose.msra.mxu0 %v1567
        %1571 = vmatprep.subr.bf16.mxu0 0
        %1572 = vmatpush1.bf16.xpose.msra.mxu0 0
        %1573 = vmatprep.subr.bf16.mxu0 0
        %1574 = vmatpush1.bf16.xpose.msra.mxu0 0
        %1575 = vmatprep.subr.bf16.mxu0 0
        %1576 = vmatpush1.bf16.xpose.msra.mxu0 0
        %1577 = vmatprep.subr.bf16.mxu0 0
        %1578 = vmatpush1.bf16.xpose.msra.mxu0 0
        %1579 = vmatprep.subr.bf16.mxu0 0
        %1580 = vmatpush1.bf16.xpose.msra.mxu0 0
        %1581 = vmatprep.subr.bf16.mxu0 0
        %1582 = vmatpush1.bf16.xpose.msra.mxu0 0
        %1583 = vmatprep.subr.bf16.mxu0 0
        %1584 = vmatpush1.bf16.xpose.msra.mxu0 0
        %1585 = vmatprep.subr.bf16.mxu0 0
        %1586 = vmatpush1.bf16.xpose.msra.mxu0 0
        %1587 = vmatprep.subr.bf16.mxu0 0
        %1588 = vmatpush1.bf16.xpose.msra.mxu0 0
        %1589 = vmatprep.subr.bf16.mxu0 0
        %1590 = vmatpush1.bf16.xpose.msra.mxu0 0
        %1591 = vmatprep.subr.bf16.mxu0 0
        %1592 = vmatpush1.bf16.xpose.msra.mxu0 0
        %1593 = vmatprep.subr.bf16.mxu0 0
        %1594 = vmatpush1.bf16.xpose.msra.mxu0 0
        %1595 = vmatprep.subr.bf16.mxu0 0
        %1596 = vmatpush1.bf16.xpose.msra.mxu0 0
        %1597 = vmatprep.subr.bf16.mxu0 0
        %1598 = vmatpush1.bf16.xpose.msra.mxu0 0
        %1599 = vmatprep.subr.bf16.mxu0 0
        %1600 = vmatpush1.bf16.xpose.msra.mxu0 0
        %1601 = vmatprep.mubr.bf16.mxu0 0
        %1602 = vmatmul.mubr.bf16.gmra.mrb[0].mxu0 %v1564
        %v1603 = vpop.f32.mrb[0].mxu0
        %v1604 = vadd.f32 %v844, %v1603
        %v1605 = vpop.f32.mrb[0].mxu0
        %v1606 = vpop.f32.mrb[0].mxu0
        %v1607 = vpop.f32.mrb[0].mxu0
        %1608 = vdwg.mxu0
        %v1609 = vsel %vm850, %v1554, -inf
        %1610 = vmax.xlane.f32.xlu0 %v1609
        %v1611 = vpop.xlane.xlu0 %1610
        %v1612 = vsel %vm850, %v1604, -inf
        %1613 = vmax.xlane.f32.xlu0 %v1612
        %v1614 = vpop.xlane.xlu0 %1613
        %v1615 = vsub.f32 %v1554, %v1611
        %v1616 = vsub.f32 %v1604, %v1614
        %v1617 = vmul.f32 %v1615, 1.442695
        %v1618 = vpow.pop %v1617
        %v1619 = vmul.f32 %v1616, 1.442695
        %v1620 = vpow.pop %v1619
        %v1621 = vsel %vm850, %v1618, 0.0
        %1622 = vadd.xlane.f32.xlu0 %v1621
        %v1623 = vpop.xlane.xlu0 %1622
        %v1624 = vsel %vm850, %v1620, 0.0
        %1625 = vadd.xlane.f32.xlu0 %v1624
        %v1626 = vpop.xlane.xlu0 %1625
        %v1627 = vrcp.pop %v1623
        %v1628 = vrcp.pop %v1626
        %v1629 = vmul.f32 %v1618, %v1627
        %v1630 = vmul.f32 %v1620, %v1628
        %v1631 = vpack.c.bf16 %v1629, %v1629
        %v1632 = vpack.c.bf16 %v1630, %v1630
        %1633 = vrot.lane.b32.xlu0 %v835, 40
        %v1634 = vpop.permute.xlu0 %1633
        %v1636 = vsel %vm850, %v1631, 0
        %v1639 = vsel %vm975, %v1634, 0
        %1641 = vmatprep.subr.bf16.mxu0 0
        %1642 = vmatpush1.bf16.msra.mxu0 %v1639
        %1643 = vmatprep.subr.bf16.mxu0 0
        %1644 = vmatpush1.bf16.msra.mxu0 0
        %1645 = vmatprep.subr.bf16.mxu0 0
        %1646 = vmatpush1.bf16.msra.mxu0 0
        %1647 = vmatprep.subr.bf16.mxu0 0
        %1648 = vmatpush1.bf16.msra.mxu0 0
        %1649 = vmatprep.subr.bf16.mxu0 0
        %1650 = vmatpush1.bf16.msra.mxu0 0
        %1651 = vmatprep.subr.bf16.mxu0 0
        %1652 = vmatpush1.bf16.msra.mxu0 0
        %1653 = vmatprep.subr.bf16.mxu0 0
        %1654 = vmatpush1.bf16.msra.mxu0 0
        %1655 = vmatprep.subr.bf16.mxu0 0
        %1656 = vmatpush1.bf16.msra.mxu0 0
        %1657 = vmatprep.subr.bf16.mxu0 0
        %1658 = vmatpush1.bf16.msra.mxu0 0
        %1659 = vmatprep.subr.bf16.mxu0 0
        %1660 = vmatpush1.bf16.msra.mxu0 0
        %1661 = vmatprep.subr.bf16.mxu0 0
        %1662 = vmatpush1.bf16.msra.mxu0 0
        %1663 = vmatprep.subr.bf16.mxu0 0
        %1664 = vmatpush1.bf16.msra.mxu0 0
        %1665 = vmatprep.subr.bf16.mxu0 0
        %1666 = vmatpush1.bf16.msra.mxu0 0
        %1667 = vmatprep.subr.bf16.mxu0 0
        %1668 = vmatpush1.bf16.msra.mxu0 0
        %1669 = vmatprep.subr.bf16.mxu0 0
        %1670 = vmatpush1.bf16.msra.mxu0 0
        %1671 = vmatprep.subr.bf16.mxu0 0
        %1672 = vmatpush1.bf16.msra.mxu0 0
        %1673 = vmatprep.mubr.bf16.mxu0 0
        %1674 = vmatmul.mubr.bf16.gmra.mrb[0].mxu0 %v1636
        %v1675 = vpop.f32.mrb[0].mxu0
        %v1676 = vadd.f32 0.0, %v1675
        %v1677 = vpop.f32.mrb[0].mxu0
        %v1678 = vpop.f32.mrb[0].mxu0
        %v1679 = vpop.f32.mrb[0].mxu0
        %1680 = vdwg.mxu0
        %1681 = vrot.lane.b32.xlu0 %v836, 40
        %v1682 = vpop.permute.xlu0 %1681
        %v1684 = vsel %vm850, %v1632, 0
        %v1687 = vsel %vm975, %v1682, 0
        %1689 = vmatprep.subr.bf16.mxu0 0
        %1690 = vmatpush1.bf16.msra.mxu0 %v1687
        %1691 = vmatprep.subr.bf16.mxu0 0
        %1692 = vmatpush1.bf16.msra.mxu0 0
        %1693 = vmatprep.subr.bf16.mxu0 0
        %1694 = vmatpush1.bf16.msra.mxu0 0
        %1695 = vmatprep.subr.bf16.mxu0 0
        %1696 = vmatpush1.bf16.msra.mxu0 0
        %1697 = vmatprep.subr.bf16.mxu0 0
        %1698 = vmatpush1.bf16.msra.mxu0 0
        %1699 = vmatprep.subr.bf16.mxu0 0
        %1700 = vmatpush1.bf16.msra.mxu0 0
        %1701 = vmatprep.subr.bf16.mxu0 0
        %1702 = vmatpush1.bf16.msra.mxu0 0
        %1703 = vmatprep.subr.bf16.mxu0 0
        %1704 = vmatpush1.bf16.msra.mxu0 0
        %1705 = vmatprep.subr.bf16.mxu0 0
        %1706 = vmatpush1.bf16.msra.mxu0 0
        %1707 = vmatprep.subr.bf16.mxu0 0
        %1708 = vmatpush1.bf16.msra.mxu0 0
        %1709 = vmatprep.subr.bf16.mxu0 0
        %1710 = vmatpush1.bf16.msra.mxu0 0
        %1711 = vmatprep.subr.bf16.mxu0 0
        %1712 = vmatpush1.bf16.msra.mxu0 0
        %1713 = vmatprep.subr.bf16.mxu0 0
        %1714 = vmatpush1.bf16.msra.mxu0 0
        %1715 = vmatprep.subr.bf16.mxu0 0
        %1716 = vmatpush1.bf16.msra.mxu0 0
        %1717 = vmatprep.subr.bf16.mxu0 0
        %1718 = vmatpush1.bf16.msra.mxu0 0
        %1719 = vmatprep.subr.bf16.mxu0 0
        %1720 = vmatpush1.bf16.msra.mxu0 0
        %1721 = vmatprep.mubr.bf16.mxu0 0
        %1722 = vmatmul.mubr.bf16.gmra.mrb[0].mxu0 %v1684
        %v1723 = vpop.f32.mrb[0].mxu0
        %v1724 = vadd.f32 0.0, %v1723
        %v1725 = vpop.f32.mrb[0].mxu0
        %v1726 = vpop.f32.mrb[0].mxu0
        %v1727 = vpop.f32.mrb[0].mxu0
        %1728 = vdwg.mxu0
        %1731 = vrot.lane.b32.xlu0 %v1236, 8
        %v1732 = vpop.permute.xlu0 %1731
        %1733 = vrot.lane.b32.xlu0 %v1284, 8
        %v1734 = vpop.permute.xlu0 %1733
        %1739 = vrot.lane.b32.xlu0 %v1456, 16
        %v1740 = vpop.permute.xlu0 %1739
        %1741 = vrot.lane.b32.xlu0 %v1504, 16
        %v1742 = vpop.permute.xlu0 %1741
        %1747 = vrot.lane.b32.xlu0 %v1676, 24
        %v1748 = vpop.permute.xlu0 %1747
        %1749 = vrot.lane.b32.xlu0 %v1724, 24
        %v1750 = vpop.permute.xlu0 %1749
        %v1753 = vsel %vm850, %v1014, %v1732
        %v1754 = vsel %vm850, %v1062, %v1734
        %vm1755 = vcmask 130048
        %v1756 = vsel %vm1755, %v1753, %v1740
        %v1757 = vsel %vm1755, %v1754, %v1742
        %vm1758 = vcmask 195584
        %v1759 = vsel %vm1758, %v1756, %v1748
        %v1760 = vsel %vm1758, %v1757, %v1750
        %v1761 = vpack.c.bf16 %v1760, %v1759
        %v1762 = vld [vmem:[%s635] sm:$0xf]
        %v1763 = vld [vmem:[%s635 + $0x4] sm:$0xf]
        %v1764 = vld [vmem:[%s635 + $0x8] sm:$0xf]
        %v1765 = vld [vmem:[%s635 + $0xc] sm:$0xf]
        %v1766 = vld [vmem:[%s638] sm:$0x1]
        %v1768 = vlaneseq
        %v1769 = vshrl.u32 %v1768, 7
        %v1770 = vsub.s32 0, %v1769
        %v1771 = vrot.slane %v1766, %v1770
        %v1777 = vunpack.c.l.b16 %v1762
        %v1778 = vunpack.c.l.b16 %v1763
        %v1779 = vunpack.c.l.b16 %v1764
        %v1780 = vunpack.c.l.b16 %v1765
        %v1781 = vpack.c.b16 %v1778, %v1777
        %v1782 = vpack.c.b16 %v1780, %v1779
        %v1786 = vsel %vm786, %v1761, 0
        %1788 = vmatprep.subr.bf16.mxu0 0
        %1789 = vmatpush1.bf16.msra.mxu0 %v1781
        %1790 = vmatprep.subr.bf16.mxu0 0
        %1791 = vmatpush1.bf16.msra.mxu0 %v1782
        %1792 = vmatprep.subr.bf16.mxu0 0
        %1793 = vmatpush1.bf16.msra.mxu0 0
        %1794 = vmatprep.subr.bf16.mxu0 0
        %1795 = vmatpush1.bf16.msra.mxu0 0
        %1796 = vmatprep.subr.bf16.mxu0 0
        %1797 = vmatpush1.bf16.msra.mxu0 0
        %1798 = vmatprep.subr.bf16.mxu0 0
        %1799 = vmatpush1.bf16.msra.mxu0 0
        %1800 = vmatprep.subr.bf16.mxu0 0
        %1801 = vmatpush1.bf16.msra.mxu0 0
        %1802 = vmatprep.subr.bf16.mxu0 0
        %1803 = vmatpush1.bf16.msra.mxu0 0
        %1804 = vmatprep.subr.bf16.mxu0 0
        %1805 = vmatpush1.bf16.msra.mxu0 0
        %1806 = vmatprep.subr.bf16.mxu0 0
        %1807 = vmatpush1.bf16.msra.mxu0 0
        %1808 = vmatprep.subr.bf16.mxu0 0
        %1809 = vmatpush1.bf16.msra.mxu0 0
        %1810 = vmatprep.subr.bf16.mxu0 0
        %1811 = vmatpush1.bf16.msra.mxu0 0
        %1812 = vmatprep.subr.bf16.mxu0 0
        %1813 = vmatpush1.bf16.msra.mxu0 0
        %1814 = vmatprep.subr.bf16.mxu0 0
        %1815 = vmatpush1.bf16.msra.mxu0 0
        %1816 = vmatprep.subr.bf16.mxu0 0
        %1817 = vmatpush1.bf16.msra.mxu0 0
        %1818 = vmatprep.subr.bf16.mxu0 0
        %1819 = vmatpush1.bf16.msra.mxu0 0
        %1820 = vmatprep.mubr.bf16.mxu0 0
        %1821 = vmatmul.mubr.bf16.gmra.mrb[0].mxu0 %v1786
        %v1822 = vpop.f32.mrb[0].mxu0
        %v1823 = vadd.f32 %v1771, %v1822
        %v1824 = vpop.f32.mrb[0].mxu0
        %v1825 = vpop.f32.mrb[0].mxu0
        %v1826 = vadd.f32 %v1771, %v1825
        %v1827 = vpop.f32.mrb[0].mxu0
        %1828 = vdwg.mxu0
        %v1829 = vadd.f32 %v1823, %v736
        %v1830 = vadd.f32 %v1826, %v737
        %v1831 = vld [vmem:[%s641] sm:$0x1]
        %v1832 = vld [vmem:[%s644] sm:$0x1]
        %v1833 = vsel %vm786, %v1829, 0.0
        %1834 = vadd.xlane.f32.xlu0 %v1833
        %v1835 = vpop.xlane.xlu0 %1834
        %v1836 = vsel %vm786, %v1830, 0.0
        %1837 = vadd.xlane.f32.xlu0 %v1836
        %v1838 = vpop.xlane.xlu0 %1837
        %v1839 = vrcp.pop 32.0
        %v1840 = vmul.f32 %v1835, %v1839
        %v1841 = vmul.f32 %v1838, %v1839
        %v1842 = vsub.f32 %v1829, %v1840
        %v1843 = vsub.f32 %v1830, %v1841
        %v1844 = vmul.f32 %v1842, %v1842
        %v1845 = vmul.f32 %v1843, %v1843
        %v1846 = vsel %vm786, %v1844, 0.0
        %1847 = vadd.xlane.f32.xlu0 %v1846
        %v1848 = vpop.xlane.xlu0 %1847
        %v1849 = vsel %vm786, %v1845, 0.0
        %1850 = vadd.xlane.f32.xlu0 %v1849
        %v1851 = vpop.xlane.xlu0 %1850
        %v1852 = vmul.f32 %v1848, %v1839
        %v1853 = vmul.f32 %v1851, %v1839
        %v1854 = vadd.f32 %v1852, 1e-12
        %v1855 = vadd.f32 %v1853, 1e-12
        %v1856 = vrsqrt.pop %v1854
        %v1857 = vrsqrt.pop %v1855
        %v1858 = vmul.f32 %v1842, %v1856
        %v1859 = vmul.f32 %v1843, %v1857
        %v1861 = vlaneseq
        %v1862 = vshrl.u32 %v1861, 7
        %v1863 = vsub.s32 0, %v1862
        %v1864 = vrot.slane %v1831, %v1863
        %v1866 = vmul.f32 %v1858, %v1864
        %v1867 = vmul.f32 %v1859, %v1864
        %v1869 = vlaneseq
        %v1870 = vshrl.u32 %v1869, 7
        %v1871 = vsub.s32 0, %v1870
        %v1872 = vrot.slane %v1832, %v1871
        %v1874 = vadd.f32 %v1866, %v1872
        %v1875 = vadd.f32 %v1867, %v1872
        %v1876 = vpack.c.bf16 %v1875, %v1874
        %v1877 = vld [vmem:[%s649] sm:$0xf]
        %v1878 = vld [vmem:[%s649 + $0x4] sm:$0xf]
        %v1879 = vld [vmem:[%s649 + $0x8] sm:$0xf]
        %v1880 = vld [vmem:[%s649 + $0xc] sm:$0xf]
        %v1881 = vld [vmem:[%s652] sm:$0x1]
        %v1883 = vlaneseq
        %v1884 = vshrl.u32 %v1883, 7
        %v1885 = vsub.s32 0, %v1884
        %v1886 = vrot.slane %v1881, %v1885
        %v1892 = vunpack.c.l.b16 %v1877
        %v1893 = vunpack.c.l.b16 %v1878
        %v1894 = vunpack.c.l.b16 %v1879
        %v1895 = vunpack.c.l.b16 %v1880
        %v1896 = vpack.c.b16 %v1893, %v1892
        %v1897 = vpack.c.b16 %v1895, %v1894
        %v1901 = vsel %vm786, %v1876, 0
        %1903 = vmatprep.subr.bf16.mxu0 0
        %1904 = vmatpush1.bf16.msra.mxu0 %v1896
        %1905 = vmatprep.subr.bf16.mxu0 0
        %1906 = vmatpush1.bf16.msra.mxu0 %v1897
        %1907 = vmatprep.subr.bf16.mxu0 0
        %1908 = vmatpush1.bf16.msra.mxu0 0
        %1909 = vmatprep.subr.bf16.mxu0 0
        %1910 = vmatpush1.bf16.msra.mxu0 0
        %1911 = vmatprep.subr.bf16.mxu0 0
        %1912 = vmatpush1.bf16.msra.mxu0 0
        %1913 = vmatprep.subr.bf16.mxu0 0
        %1914 = vmatpush1.bf16.msra.mxu0 0
        %1915 = vmatprep.subr.bf16.mxu0 0
        %1916 = vmatpush1.bf16.msra.mxu0 0
        %1917 = vmatprep.subr.bf16.mxu0 0
        %1918 = vmatpush1.bf16.msra.mxu0 0
        %1919 = vmatprep.subr.bf16.mxu0 0
        %1920 = vmatpush1.bf16.msra.mxu0 0
        %1921 = vmatprep.subr.bf16.mxu0 0
        %1922 = vmatpush1.bf16.msra.mxu0 0
        %1923 = vmatprep.subr.bf16.mxu0 0
        %1924 = vmatpush1.bf16.msra.mxu0 0
        %1925 = vmatprep.subr.bf16.mxu0 0
        %1926 = vmatpush1.bf16.msra.mxu0 0
        %1927 = vmatprep.subr.bf16.mxu0 0
        %1928 = vmatpush1.bf16.msra.mxu0 0
        %1929 = vmatprep.subr.bf16.mxu0 0
        %1930 = vmatpush1.bf16.msra.mxu0 0
        %1931 = vmatprep.subr.bf16.mxu0 0
        %1932 = vmatpush1.bf16.msra.mxu0 0
        %1933 = vmatprep.subr.bf16.mxu0 0
        %1934 = vmatpush1.bf16.msra.mxu0 0
        %1935 = vmatprep.mubr.bf16.mxu0 0
        %1936 = vmatmul.mubr.bf16.gmra.mrb[0].mxu0 %v1901
        %v1937 = vpop.f32.mrb[0].mxu0
        %v1938 = vadd.f32 %v1886, %v1937
        %v1939 = vpop.f32.mrb[0].mxu0
        %v1940 = vpop.f32.mrb[0].mxu0
        %v1941 = vadd.f32 %v1886, %v1940
        %v1942 = vpop.f32.mrb[0].mxu0
        %1943 = vdwg.mxu0
        %v1944 = vmul.f32 %v1938, %v1938
        %v1945 = vmul.f32 %v1941, %v1941
        %v1946 = vmul.f32 %v1938, %v1944
        %v1947 = vmul.f32 %v1941, %v1945
        %v1948 = vmul.f32 %v1946, 0.044715
        %v1949 = vmul.f32 %v1947, 0.044715
        %v1950 = vadd.f32 %v1938, %v1948
        %v1951 = vadd.f32 %v1941, %v1949
        %v1952 = vmul.f32 %v1950, 0.7978846
        %v1953 = vmul.f32 %v1951, 0.7978846
        %v1954 = vtanh.pop %v1952
        %v1955 = vtanh.pop %v1953
        %v1956 = vadd.f32 %v1954, 1.0
        %v1957 = vadd.f32 %v1955, 1.0
        %v1958 = vmul.f32 %v1956, 0.5
        %v1959 = vmul.f32 %v1957, 0.5
        %v1960 = vmul.f32 %v1938, %v1958
        %v1961 = vmul.f32 %v1941, %v1959
        %v1962 = vpack.c.bf16 %v1961, %v1960
        %v1963 = vld [vmem:[%s657] sm:$0xf]
        %v1964 = vld [vmem:[%s657 + $0x4] sm:$0xf]
        %v1965 = vld [vmem:[%s657 + $0x8] sm:$0xf]
        %v1966 = vld [vmem:[%s657 + $0xc] sm:$0xf]
        %v1967 = vld [vmem:[%s657 + $0x10] sm:$0xf]
        %v1968 = vld [vmem:[%s657 + $0x14] sm:$0xf]
        %v1969 = vld [vmem:[%s657 + $0x18] sm:$0xf]
        %v1970 = vld [vmem:[%s657 + $0x1c] sm:$0xf]
        %v1971 = vld [vmem:[%s660] sm:$0x1]
        %v1973 = vlaneseq
        %v1974 = vshrl.u32 %v1973, 7
        %v1975 = vsub.s32 0, %v1974
        %v1976 = vrot.slane %v1971, %v1975
        %v1986 = vunpack.c.l.b16 %v1963
        %v1987 = vunpack.c.l.b16 %v1964
        %v1988 = vunpack.c.l.b16 %v1965
        %v1989 = vunpack.c.l.b16 %v1966
        %v1990 = vunpack.c.l.b16 %v1967
        %v1991 = vunpack.c.l.b16 %v1968
        %v1992 = vunpack.c.l.b16 %v1969
        %v1993 = vunpack.c.l.b16 %v1970
        %v1994 = vpack.c.b16 %v1987, %v1986
        %v1995 = vpack.c.b16 %v1989, %v1988
        %v1996 = vpack.c.b16 %v1991, %v1990
        %v1997 = vpack.c.b16 %v1993, %v1992
        %vm2002 = vcmask 523264
        %v2004 = vsel %vm2002, %v1962, 0
        %2006 = vmatprep.subr.bf16.mxu0 0
        %2007 = vmatpush1.bf16.msra.mxu0 %v1994
        %2008 = vmatprep.subr.bf16.mxu0 0
        %2009 = vmatpush1.bf16.msra.mxu0 %v1995
        %2010 = vmatprep.subr.bf16.mxu0 0
        %2011 = vmatpush1.bf16.msra.mxu0 %v1996
        %2012 = vmatprep.subr.bf16.mxu0 0
        %2013 = vmatpush1.bf16.msra.mxu0 %v1997
        %2014 = vmatprep.subr.bf16.mxu0 0
        %2015 = vmatpush1.bf16.msra.mxu0 0
        %2016 = vmatprep.subr.bf16.mxu0 0
        %2017 = vmatpush1.bf16.msra.mxu0 0
        %2018 = vmatprep.subr.bf16.mxu0 0
        %2019 = vmatpush1.bf16.msra.mxu0 0
        %2020 = vmatprep.subr.bf16.mxu0 0
        %2021 = vmatpush1.bf16.msra.mxu0 0
        %2022 = vmatprep.subr.bf16.mxu0 0
        %2023 = vmatpush1.bf16.msra.mxu0 0
        %2024 = vmatprep.subr.bf16.mxu0 0
        %2025 = vmatpush1.bf16.msra.mxu0 0
        %2026 = vmatprep.subr.bf16.mxu0 0
        %2027 = vmatpush1.bf16.msra.mxu0 0
        %2028 = vmatprep.subr.bf16.mxu0 0
        %2029 = vmatpush1.bf16.msra.mxu0 0
        %2030 = vmatprep.subr.bf16.mxu0 0
        %2031 = vmatpush1.bf16.msra.mxu0 0
        %2032 = vmatprep.subr.bf16.mxu0 0
        %2033 = vmatpush1.bf16.msra.mxu0 0
        %2034 = vmatprep.subr.bf16.mxu0 0
        %2035 = vmatpush1.bf16.msra.mxu0 0
        %2036 = vmatprep.subr.bf16.mxu0 0
        %2037 = vmatpush1.bf16.msra.mxu0 0
        %2038 = vmatprep.mubr.bf16.mxu0 0
        %2039 = vmatmul.mubr.bf16.gmra.mrb[0].mxu0 %v2004
        %v2040 = vpop.f32.mrb[0].mxu0
        %v2041 = vadd.f32 %v1976, %v2040
        %v2042 = vpop.f32.mrb[0].mxu0
        %v2043 = vpop.f32.mrb[0].mxu0
        %v2044 = vadd.f32 %v1976, %v2043
        %v2045 = vpop.f32.mrb[0].mxu0
        %2046 = vdwg.mxu0
        %v2047 = vadd.f32 %v2041, %v1874
        %v2048 = vadd.f32 %v2044, %v1875
        %v2049 = vld [vmem:[%s663] sm:$0x1]
        %v2050 = vld [vmem:[%s666] sm:$0x1]
        %v2051 = vsel %vm786, %v2047, 0.0
        %2052 = vadd.xlane.f32.xlu0 %v2051
        %v2053 = vpop.xlane.xlu0 %2052
        %v2054 = vsel %vm786, %v2048, 0.0
        %2055 = vadd.xlane.f32.xlu0 %v2054
        %v2056 = vpop.xlane.xlu0 %2055
        %v2057 = vmul.f32 %v2053, %v1839
        %v2058 = vmul.f32 %v2056, %v1839
        %v2059 = vsub.f32 %v2047, %v2057
        %v2060 = vsub.f32 %v2048, %v2058
        %v2061 = vmul.f32 %v2059, %v2059
        %v2062 = vmul.f32 %v2060, %v2060
        %v2063 = vsel %vm786, %v2061, 0.0
        %2064 = vadd.xlane.f32.xlu0 %v2063
        %v2065 = vpop.xlane.xlu0 %2064
        %v2066 = vsel %vm786, %v2062, 0.0
        %2067 = vadd.xlane.f32.xlu0 %v2066
        %v2068 = vpop.xlane.xlu0 %2067
        %v2069 = vmul.f32 %v2065, %v1839
        %v2070 = vmul.f32 %v2068, %v1839
        %v2071 = vadd.f32 %v2069, 1e-12
        %v2072 = vadd.f32 %v2070, 1e-12
        %v2073 = vrsqrt.pop %v2071
        %v2074 = vrsqrt.pop %v2072
        %v2075 = vmul.f32 %v2059, %v2073
        %v2076 = vmul.f32 %v2060, %v2074
        %v2078 = vlaneseq
        %v2079 = vshrl.u32 %v2078, 7
        %v2080 = vsub.s32 0, %v2079
        %v2081 = vrot.slane %v2049, %v2080
        %v2083 = vmul.f32 %v2075, %v2081
        %v2084 = vmul.f32 %v2076, %v2081
        %v2086 = vlaneseq
        %v2087 = vshrl.u32 %v2086, 7
        %v2088 = vsub.s32 0, %v2087
        %v2089 = vrot.slane %v2050, %v2088
        %v2091 = vadd.f32 %v2083, %v2089
        %v2092 = vadd.f32 %v2084, %v2089
        %2093 = vst.msk [vmem:[#allocation6] sm:$0xff] %vm786, %v2091
        %2094 = vst.msk [vmem:[#allocation6 + $0x8] sm:$0xff] %vm786, %v2092
        // Predicated region
        $region93: #{tpu_custom_call.1} parent=79 // pred_check
          %p2095 = pneg %p417
        $region94: #{tpu_custom_call.1} parent=79 // pred_check_branch
          %2097 = sbr.rel (%p2095) target = $region96
        $region95: #{tpu_custom_call.1} parent=79 // pred_region
          %s2099 = ssub.s32 256, 256
          %2100 = vsyncadd [#allocation5], %s2099
          %s2101 = sshll.u32 [#allocation6], 4
          %s2102 = int_to_ptr.vmem [resolvable:$true] %s2101
          %2107 = dma.vmem_to_hbm [thread:$0]  %s2102, 256, %s16, [#allocation5], 128, 128, 8
        $region96: #{tpu_custom_call.1} parent=79 // pred_fallthru
          _
        // Predicated region
        $region97: #{tpu_custom_call.1} parent=79 // pred_check
          %p2108 = pneg %p417
        $region98: #{tpu_custom_call.1} parent=79 // pred_check_branch
          %2110 = sbr.rel (%p2108) target = $region100
        $region99: #{tpu_custom_call.1} parent=79 // pred_region
          %2111 = dma.done [#allocation5], 256
        $region100: #{tpu_custom_call.1} parent=79 // pred_fallthru
          _
      $region80: #{tpu_custom_call.1} parent=5 // pred_fallthru
        _
      %p2112 = scmp.le.s32.totalorder 2, %s24
      // Predicated region
      $region101: #{tpu_custom_call.1} parent=5 // pred_check
        %p2113 = pneg %p2112
      $region102: #{tpu_custom_call.1} parent=5 // pred_check_branch
        %2115 = sbr.rel (%p2113) target = $region104
      $region103: #{tpu_custom_call.1} parent=5 // pred_region
        %s2116 = ssub.s32 %s24, 2
      $region104: #{tpu_custom_call.1} parent=5 // pred_fallthru
        _
    $region6: #{tpu_custom_call.1} parent=1 // loop_footer
      %s28 = sadd.s32 1, %s24
    $region7: #{tpu_custom_call.1} parent=1 // loop_footer_branch
      %23 = sbr.rel target = $region3
    $region8: #{tpu_custom_call.1} parent=1 // loop_exit
      _
    %2117 = vsyncpa [#allocation4], 1
    %s2118 = scalar_lea.sflag [#allocation4], 1
    %2119 = vsyncpa %s2118, 1
    %2120 = vsyncpa [#allocation5], 1
    %s2121 = scalar_lea.sflag [#allocation5], 1
    %2122 = vsyncpa %s2121, 1
  %2123 = vsyncmov [#allocation2]
  %s2124 = vpop.sfrf %2123
  %p2125 = scmp.eq.s32.totalorder %s2124, 0
  %p2126 = pneg %p2125
  %2128 = shalt.err (%p2126)

</llo_original>
